<compile_context>
chip_gen: v6e
topology: v6e:2x2x1
jax: 0.10.0
libtpu: 0.0.40
codegen_flags: <defaults>
</compile_context>

<pallas_src>
import functools

import jax
import jax.numpy as jnp
from jax.experimental import pallas as pl
from jax.experimental.pallas import tpu as pltpu

HIDDEN_DIM = 32
INPUT_DIM = 1
NUM_LAYERS = 2
OUTPUT_DIM = 1


def gru_kernel(x_ref,
               wih0_ref, whh0_ref, bih0_ref, bhh0_ref,
               wih1_ref, whh1_ref, bih1_ref, bhh1_ref,
               fcw_ref, fcb_ref,
               out_ref,
               h0_all_s,
               *, seq_len, batch):
    """Full 2-layer GRU over time + final FC, everything resident in VMEM."""
    T, B = seq_len, batch
    I = x_ref.shape[1]
    H = whh0_ref.shape[0]
    H2, H3 = 2 * H, 3 * H

    # ---- Hoist every weight / bias load out of the recurrence. ----
    whh0 = whh0_ref[...]
    whh1 = whh1_ref[...]
    wih1 = wih1_ref[...]
    bih1 = bih1_ref[...]
    # Pre-broadcast recurrent biases once (no per-step broadcast_in_dim).
    bhh0 = jnp.broadcast_to(bhh0_ref[...], (B, H3))
    bhh1 = jnp.broadcast_to(bhh1_ref[...], (B, H3))

    # ---- Layer-0 input projection for all T steps: off the serial path. ----
    x_all = x_ref[...]                                        # [T*B, I]
    if I == 1:
        # rank-1 "matmul" -> pure VPU broadcast multiply, skip the MXU.
        gi0_all = x_all * wih0_ref[...] + bih0_ref[...]       # [T*B, 3H]
    else:
        gi0_all = (jnp.dot(x_all, wih0_ref[...],
                           preferred_element_type=jnp.float32)
                   + bih0_ref[...])

    def cell_step(gi, h_prev, whh, bhh_b):
        # Only this h_prev @ whh matmul sits on the recurrent critical path.
        gh = jnp.dot(h_prev, whh, preferred_element_type=jnp.float32) + bhh_b
        rz = jax.nn.sigmoid(gi[:, :H2] + gh[:, :H2])          # r and z in one EUP pass
        r = rz[:, :H]
        z = rz[:, H:]
        n = jnp.tanh(gi[:, H2:] + r * gh[:, H2:])
        return (1.0 - z) * n + z * h_prev

    # ---- Pass 1: layer-0 recurrence (fully unrolled, T static). ----
    h0 = jnp.zeros((B, H), jnp.float32)
    for t in range(T):
        gi0_t = gi0_all[t * B:(t + 1) * B, :]
        h0 = cell_step(gi0_t, h0, whh0, bhh0)
        h0_all_s[t * B:(t + 1) * B, :] = h0

    # ---- Layer-1 input projection: ONE batched MXU matmul for all T steps. ----
    gi1_all = (jnp.dot(h0_all_s[...], wih1,
                       preferred_element_type=jnp.float32)
               + bih1)                                        # [T*B, 3H]

    # ---- Pass 2: layer-1 recurrence (fully unrolled). ----
    h1 = jnp.zeros((B, H), jnp.float32)
    for t in range(T):
        gi1_t = gi1_all[t * B:(t + 1) * B, :]
        h1 = cell_step(gi1_t, h1, whh1, bhh1)

    # ---- Final FC on the last hidden state of the top layer. ----
    # TODO(synk): out is [B, 1] -> sub-lane masked store; negligible at this size.
    out_ref[...] = (jnp.dot(h1, fcw_ref[...],
                            preferred_element_type=jnp.float32)
                    + fcb_ref[...])


@jax.jit
def gru_forward(x_btI, params):
    """x_btI: [B, T, I] float32 (batch-first, like PyTorch). Returns [B, O]."""
    B, T, I = x_btI.shape
    H = HIDDEN_DIM
    O = OUTPUT_DIM

    # Time-major, flattened to [T*B, I] in the wrapper so the kernel never reshapes.
    x_flat = jnp.transpose(x_btI, (1, 0, 2)).reshape(T * B, I)

    (wih0, whh0, bih0, bhh0,
     wih1, whh1, bih1, bhh1,
     fcw, fcb) = params

    vmem = lambda: pl.BlockSpec(memory_space=pltpu.MemorySpace.VMEM)

    out = pl.pallas_call(
        functools.partial(gru_kernel, seq_len=T, batch=B),
        out_shape=jax.ShapeDtypeStruct((B, O), jnp.float32),
        in_specs=[vmem() for _ in range(11)],
        out_specs=vmem(),
        scratch_shapes=[
            pltpu.VMEM((T * B, H), jnp.float32),   # all layer-0 hidden states
        ],
    )(x_flat,
      wih0, whh0, bih0, bhh0,
      wih1, whh1, bih1, bhh1,
      fcw, fcb)
    return out


def init_params(key):
    """Deterministic parameter init (PyTorch-style uniform(-1/sqrt(H), 1/sqrt(H)))."""
    H, I, O = HIDDEN_DIM, INPUT_DIM, OUTPUT_DIM
    k = 1.0 / jnp.sqrt(jnp.float32(H))
    keys = jax.random.split(key, 10)

    def u(kk, shape):
        return jax.random.uniform(kk, shape, jnp.float32, -k, k)

    # weights stored already transposed for x @ W: [in_dim, 3H]; gate order r,z,n
    wih0 = u(keys[0], (I, 3 * H))
    whh0 = u(keys[1], (H, 3 * H))
    bih0 = u(keys[2], (1, 3 * H))
    bhh0 = u(keys[3], (1, 3 * H))
    wih1 = u(keys[4], (H, 3 * H))     # layer-1 input is layer-0 hidden (size H)
    whh1 = u(keys[5], (H, 3 * H))
    bih1 = u(keys[6], (1, 3 * H))
    bhh1 = u(keys[7], (1, 3 * H))
    fcw = jax.random.uniform(keys[8], (H, O), jnp.float32, -k, k)
    fcb = jax.random.uniform(keys[9], (1, O), jnp.float32, -k, k)
    return (wih0, whh0, bih0, bhh0, wih1, whh1, bih1, bhh1, fcw, fcb)


def gru_reference(x_btI, params):
    """Pure-JAX reference with identical semantics (for verification)."""
    (wih0, whh0, bih0, bhh0, wih1, whh1, bih1, bhh1, fcw, fcb) = params
    B, T, I = x_btI.shape
    H = HIDDEN_DIM

    def cell(x_t, h_prev, wih, whh, bih, bhh):
        gi = x_t @ wih + bih
        gh = h_prev @ whh + bhh
        i_r, i_z, i_n = gi[:, :H], gi[:, H:2 * H], gi[:, 2 * H:]
        h_r, h_z, h_n = gh[:, :H], gh[:, H:2 * H], gh[:, 2 * H:]
        r = jax.nn.sigmoid(i_r + h_r)
        z = jax.nn.sigmoid(i_z + h_z)
        n = jnp.tanh(i_n + r * h_n)
        return (1.0 - z) * n + z * h_prev

    h0 = jnp.zeros((B, H), jnp.float32)
    h1 = jnp.zeros((B, H), jnp.float32)
    for t in range(T):
        x_t = x_btI[:, t, :]
        h0 = cell(x_t, h0, wih0, whh0, bih0, bhh0)
        h1 = cell(h0, h1, wih1, whh1, bih1, bhh1)
    return h1 @ fcw + fcb


if __name__ == "__main__":
    key = jax.random.PRNGKey(0)
    k_x, k_p = jax.random.split(key)

    B, T, I = 2, 8, INPUT_DIM          # batch=2, seq=8, input_dim=1
    x = jax.random.normal(k_x, (B, T, I), jnp.float32)
    params = init_params(k_p)

    out = gru_forward(x, params)
    out = jax.block_until_ready(out)

    ref = gru_reference(x, params)
    assert out.shape == (B, OUTPUT_DIM)
    assert jnp.allclose(out, ref, atol=1e-5, rtol=1e-5), (out, ref)

    print("KERNEL_OK")
</pallas_src>

<mosaic_0001>
module attributes {stable_mosaic.version = 11 : i64} {
  func.func @gru_kernel(%arg0: memref<16x1xf32, #tpu.memory_space<vmem>>, %arg1: memref<1x96xf32, #tpu.memory_space<vmem>>, %arg2: memref<32x96xf32, #tpu.memory_space<vmem>>, %arg3: memref<1x96xf32, #tpu.memory_space<vmem>>, %arg4: memref<1x96xf32, #tpu.memory_space<vmem>>, %arg5: memref<32x96xf32, #tpu.memory_space<vmem>>, %arg6: memref<32x96xf32, #tpu.memory_space<vmem>>, %arg7: memref<1x96xf32, #tpu.memory_space<vmem>>, %arg8: memref<1x96xf32, #tpu.memory_space<vmem>>, %arg9: memref<32x1xf32, #tpu.memory_space<vmem>>, %arg10: memref<1x1xf32, #tpu.memory_space<vmem>>, %arg11: memref<2x1xf32, #tpu.memory_space<vmem>>, %arg12: memref<16x32xf32, #tpu.memory_space<vmem>>) attributes {dimension_semantics = [], scalar_prefetch = 0 : i64, scratch_operands = 1 : i64, tpu.core_type = #tpu.core_type<tc>} {
    %c0 = arith.constant 0 : index
    %c0_0 = arith.constant 0 : index
    %0 = vector.load %arg2[%c0, %c0_0] : memref<32x96xf32, #tpu.memory_space<vmem>>, vector<32x96xf32>
    %c0_1 = arith.constant 0 : index
    %c0_2 = arith.constant 0 : index
    %1 = vector.load %arg6[%c0_1, %c0_2] : memref<32x96xf32, #tpu.memory_space<vmem>>, vector<32x96xf32>
    %c0_3 = arith.constant 0 : index
    %c0_4 = arith.constant 0 : index
    %2 = vector.load %arg5[%c0_3, %c0_4] : memref<32x96xf32, #tpu.memory_space<vmem>>, vector<32x96xf32>
    %c0_5 = arith.constant 0 : index
    %c0_6 = arith.constant 0 : index
    %3 = vector.load %arg7[%c0_5, %c0_6] : memref<1x96xf32, #tpu.memory_space<vmem>>, vector<1x96xf32>
    %c0_7 = arith.constant 0 : index
    %c0_8 = arith.constant 0 : index
    %4 = vector.load %arg4[%c0_7, %c0_8] : memref<1x96xf32, #tpu.memory_space<vmem>>, vector<1x96xf32>
    %5 = vector.shape_cast %4 : vector<1x96xf32> to vector<1x96xf32>
    %6 = vector.broadcast %5 : vector<1x96xf32> to vector<2x96xf32>
    %c0_9 = arith.constant 0 : index
    %c0_10 = arith.constant 0 : index
    %7 = vector.load %arg8[%c0_9, %c0_10] : memref<1x96xf32, #tpu.memory_space<vmem>>, vector<1x96xf32>
    %8 = vector.shape_cast %7 : vector<1x96xf32> to vector<1x96xf32>
    %9 = vector.broadcast %8 : vector<1x96xf32> to vector<2x96xf32>
    %c0_11 = arith.constant 0 : index
    %c0_12 = arith.constant 0 : index
    %10 = vector.load %arg0[%c0_11, %c0_12] : memref<16x1xf32, #tpu.memory_space<vmem>>, vector<16x1xf32>
    %c0_13 = arith.constant 0 : index
    %c0_14 = arith.constant 0 : index
    %11 = vector.load %arg1[%c0_13, %c0_14] : memref<1x96xf32, #tpu.memory_space<vmem>>, vector<1x96xf32>
    %12 = vector.broadcast %10 : vector<16x1xf32> to vector<16x96xf32>
    %13 = vector.broadcast %11 : vector<1x96xf32> to vector<16x96xf32>
    %14 = arith.mulf %12, %13 : vector<16x96xf32>
    %c0_15 = arith.constant 0 : index
    %c0_16 = arith.constant 0 : index
    %15 = vector.load %arg3[%c0_15, %c0_16] : memref<1x96xf32, #tpu.memory_space<vmem>>, vector<1x96xf32>
    %16 = vector.broadcast %15 : vector<1x96xf32> to vector<16x96xf32>
    %17 = arith.addf %14, %16 : vector<16x96xf32>
    %cst = arith.constant 0.000000e+00 : f32
    %18 = vector.broadcast %cst : f32 to vector<2x32xf32>
    %19 = vector.extract_strided_slice %17 {offsets = [0, 0], sizes = [2, 96], strides = [1, 1]} : vector<16x96xf32> to vector<2x96xf32>
    %cst_17 = arith.constant dense<0.000000e+00> : vector<2x96xf32>
    %20 = tpu.matmul %18, %0, %cst_17 {dimension_numbers = #tpu.dot_dimension_numbers<[1], [0], [0], [1], [0, 0, 1, 1], [], []>} : vector<2x32xf32>, vector<32x96xf32>, vector<2x96xf32> -> vector<2x96xf32>
    %21 = arith.addf %20, %6 : vector<2x96xf32>
    %22 = vector.extract_strided_slice %19 {offsets = [0, 0], sizes = [2, 64], strides = [1, 1]} : vector<2x96xf32> to vector<2x64xf32>
    %23 = vector.extract_strided_slice %21 {offsets = [0, 0], sizes = [2, 64], strides = [1, 1]} : vector<2x96xf32> to vector<2x64xf32>
    %24 = arith.addf %22, %23 : vector<2x64xf32>
    %25 = arith.negf %24 : vector<2x64xf32>
    %26 = math.exp %25 : vector<2x64xf32>
    %cst_18 = arith.constant 1.000000e+00 : f32
    %27 = vector.broadcast %cst_18 : f32 to vector<2x64xf32>
    %28 = arith.addf %27, %26 : vector<2x64xf32>
    %29 = arith.divf %27, %28 : vector<2x64xf32>
    %30 = vector.extract_strided_slice %29 {offsets = [0, 0], sizes = [2, 32], strides = [1, 1]} : vector<2x64xf32> to vector<2x32xf32>
    %31 = vector.extract_strided_slice %29 {offsets = [0, 32], sizes = [2, 32], strides = [1, 1]} : vector<2x64xf32> to vector<2x32xf32>
    %32 = vector.extract_strided_slice %19 {offsets = [0, 64], sizes = [2, 32], strides = [1, 1]} : vector<2x96xf32> to vector<2x32xf32>
    %33 = vector.extract_strided_slice %21 {offsets = [0, 64], sizes = [2, 32], strides = [1, 1]} : vector<2x96xf32> to vector<2x32xf32>
    %34 = arith.mulf %30, %33 : vector<2x32xf32>
    %35 = arith.addf %32, %34 : vector<2x32xf32>
    %36 = math.tanh %35 : vector<2x32xf32>
    %cst_19 = arith.constant 1.000000e+00 : f32
    %37 = vector.broadcast %cst_19 : f32 to vector<2x32xf32>
    %38 = arith.subf %37, %31 : vector<2x32xf32>
    %39 = arith.mulf %38, %36 : vector<2x32xf32>
    %40 = arith.mulf %31, %18 : vector<2x32xf32>
    %41 = arith.addf %39, %40 : vector<2x32xf32>
    %c0_20 = arith.constant 0 : index
    %c0_21 = arith.constant 0 : index
    %42 = vector.load %arg12[%c0_20, %c0_21] : memref<16x32xf32, #tpu.memory_space<vmem>>, vector<2x32xf32>
    tpu.vector_store %arg12[%c0_20, %c0_21], %41 {strides = array<i32>} : memref<16x32xf32, #tpu.memory_space<vmem>>, vector<2x32xf32>,
    %43 = vector.extract_strided_slice %17 {offsets = [2, 0], sizes = [2, 96], strides = [1, 1]} : vector<16x96xf32> to vector<2x96xf32>
    %cst_22 = arith.constant dense<0.000000e+00> : vector<2x96xf32>
    %44 = tpu.matmul %41, %0, %cst_22 {dimension_numbers = #tpu.dot_dimension_numbers<[1], [0], [0], [1], [0, 0, 1, 1], [], []>} : vector<2x32xf32>, vector<32x96xf32>, vector<2x96xf32> -> vector<2x96xf32>
    %45 = arith.addf %44, %6 : vector<2x96xf32>
    %46 = vector.extract_strided_slice %43 {offsets = [0, 0], sizes = [2, 64], strides = [1, 1]} : vector<2x96xf32> to vector<2x64xf32>
    %47 = vector.extract_strided_slice %45 {offsets = [0, 0], sizes = [2, 64], strides = [1, 1]} : vector<2x96xf32> to vector<2x64xf32>
    %48 = arith.addf %46, %47 : vector<2x64xf32>
    %49 = arith.negf %48 : vector<2x64xf32>
    %50 = math.exp %49 : vector<2x64xf32>
    %cst_23 = arith.constant 1.000000e+00 : f32
    %51 = vector.broadcast %cst_23 : f32 to vector<2x64xf32>
    %52 = arith.addf %51, %50 : vector<2x64xf32>
    %53 = arith.divf %51, %52 : vector<2x64xf32>
    %54 = vector.extract_strided_slice %53 {offsets = [0, 0], sizes = [2, 32], strides = [1, 1]} : vector<2x64xf32> to vector<2x32xf32>
    %55 = vector.extract_strided_slice %53 {offsets = [0, 32], sizes = [2, 32], strides = [1, 1]} : vector<2x64xf32> to vector<2x32xf32>
    %56 = vector.extract_strided_slice %43 {offsets = [0, 64], sizes = [2, 32], strides = [1, 1]} : vector<2x96xf32> to vector<2x32xf32>
    %57 = vector.extract_strided_slice %45 {offsets = [0, 64], sizes = [2, 32], strides = [1, 1]} : vector<2x96xf32> to vector<2x32xf32>
    %58 = arith.mulf %54, %57 : vector<2x32xf32>
    %59 = arith.addf %56, %58 : vector<2x32xf32>
    %60 = math.tanh %59 : vector<2x32xf32>
    %cst_24 = arith.constant 1.000000e+00 : f32
    %61 = vector.broadcast %cst_24 : f32 to vector<2x32xf32>
    %62 = arith.subf %61, %55 : vector<2x32xf32>
    %63 = arith.mulf %62, %60 : vector<2x32xf32>
    %64 = arith.mulf %55, %41 : vector<2x32xf32>
    %65 = arith.addf %63, %64 : vector<2x32xf32>
    %c2 = arith.constant 2 : index
    %c0_25 = arith.constant 0 : index
    %66 = vector.load %arg12[%c2, %c0_25] : memref<16x32xf32, #tpu.memory_space<vmem>>, vector<2x32xf32>
    tpu.vector_store %arg12[%c2, %c0_25], %65 {strides = array<i32>} : memref<16x32xf32, #tpu.memory_space<vmem>>, vector<2x32xf32>,
    %67 = vector.extract_strided_slice %17 {offsets = [4, 0], sizes = [2, 96], strides = [1, 1]} : vector<16x96xf32> to vector<2x96xf32>
    %cst_26 = arith.constant dense<0.000000e+00> : vector<2x96xf32>
    %68 = tpu.matmul %65, %0, %cst_26 {dimension_numbers = #tpu.dot_dimension_numbers<[1], [0], [0], [1], [0, 0, 1, 1], [], []>} : vector<2x32xf32>, vector<32x96xf32>, vector<2x96xf32> -> vector<2x96xf32>
    %69 = arith.addf %68, %6 : vector<2x96xf32>
    %70 = vector.extract_strided_slice %67 {offsets = [0, 0], sizes = [2, 64], strides = [1, 1]} : vector<2x96xf32> to vector<2x64xf32>
    %71 = vector.extract_strided_slice %69 {offsets = [0, 0], sizes = [2, 64], strides = [1, 1]} : vector<2x96xf32> to vector<2x64xf32>
    %72 = arith.addf %70, %71 : vector<2x64xf32>
    %73 = arith.negf %72 : vector<2x64xf32>
    %74 = math.exp %73 : vector<2x64xf32>
    %cst_27 = arith.constant 1.000000e+00 : f32
    %75 = vector.broadcast %cst_27 : f32 to vector<2x64xf32>
    %76 = arith.addf %75, %74 : vector<2x64xf32>
    %77 = arith.divf %75, %76 : vector<2x64xf32>
    %78 = vector.extract_strided_slice %77 {offsets = [0, 0], sizes = [2, 32], strides = [1, 1]} : vector<2x64xf32> to vector<2x32xf32>
    %79 = vector.extract_strided_slice %77 {offsets = [0, 32], sizes = [2, 32], strides = [1, 1]} : vector<2x64xf32> to vector<2x32xf32>
    %80 = vector.extract_strided_slice %67 {offsets = [0, 64], sizes = [2, 32], strides = [1, 1]} : vector<2x96xf32> to vector<2x32xf32>
    %81 = vector.extract_strided_slice %69 {offsets = [0, 64], sizes = [2, 32], strides = [1, 1]} : vector<2x96xf32> to vector<2x32xf32>
    %82 = arith.mulf %78, %81 : vector<2x32xf32>
    %83 = arith.addf %80, %82 : vector<2x32xf32>
    %84 = math.tanh %83 : vector<2x32xf32>
    %cst_28 = arith.constant 1.000000e+00 : f32
    %85 = vector.broadcast %cst_28 : f32 to vector<2x32xf32>
    %86 = arith.subf %85, %79 : vector<2x32xf32>
    %87 = arith.mulf %86, %84 : vector<2x32xf32>
    %88 = arith.mulf %79, %65 : vector<2x32xf32>
    %89 = arith.addf %87, %88 : vector<2x32xf32>
    %c4 = arith.constant 4 : index
    %c0_29 = arith.constant 0 : index
    %90 = vector.load %arg12[%c4, %c0_29] : memref<16x32xf32, #tpu.memory_space<vmem>>, vector<2x32xf32>
    tpu.vector_store %arg12[%c4, %c0_29], %89 {strides = array<i32>} : memref<16x32xf32, #tpu.memory_space<vmem>>, vector<2x32xf32>,
    %91 = vector.extract_strided_slice %17 {offsets = [6, 0], sizes = [2, 96], strides = [1, 1]} : vector<16x96xf32> to vector<2x96xf32>
    %cst_30 = arith.constant dense<0.000000e+00> : vector<2x96xf32>
    %92 = tpu.matmul %89, %0, %cst_30 {dimension_numbers = #tpu.dot_dimension_numbers<[1], [0], [0], [1], [0, 0, 1, 1], [], []>} : vector<2x32xf32>, vector<32x96xf32>, vector<2x96xf32> -> vector<2x96xf32>
    %93 = arith.addf %92, %6 : vector<2x96xf32>
    %94 = vector.extract_strided_slice %91 {offsets = [0, 0], sizes = [2, 64], strides = [1, 1]} : vector<2x96xf32> to vector<2x64xf32>
    %95 = vector.extract_strided_slice %93 {offsets = [0, 0], sizes = [2, 64], strides = [1, 1]} : vector<2x96xf32> to vector<2x64xf32>
    %96 = arith.addf %94, %95 : vector<2x64xf32>
    %97 = arith.negf %96 : vector<2x64xf32>
    %98 = math.exp %97 : vector<2x64xf32>
    %cst_31 = arith.constant 1.000000e+00 : f32
    %99 = vector.broadcast %cst_31 : f32 to vector<2x64xf32>
    %100 = arith.addf %99, %98 : vector<2x64xf32>
    %101 = arith.divf %99, %100 : vector<2x64xf32>
    %102 = vector.extract_strided_slice %101 {offsets = [0, 0], sizes = [2, 32], strides = [1, 1]} : vector<2x64xf32> to vector<2x32xf32>
    %103 = vector.extract_strided_slice %101 {offsets = [0, 32], sizes = [2, 32], strides = [1, 1]} : vector<2x64xf32> to vector<2x32xf32>
    %104 = vector.extract_strided_slice %91 {offsets = [0, 64], sizes = [2, 32], strides = [1, 1]} : vector<2x96xf32> to vector<2x32xf32>
    %105 = vector.extract_strided_slice %93 {offsets = [0, 64], sizes = [2, 32], strides = [1, 1]} : vector<2x96xf32> to vector<2x32xf32>
    %106 = arith.mulf %102, %105 : vector<2x32xf32>
    %107 = arith.addf %104, %106 : vector<2x32xf32>
    %108 = math.tanh %107 : vector<2x32xf32>
    %cst_32 = arith.constant 1.000000e+00 : f32
    %109 = vector.broadcast %cst_32 : f32 to vector<2x32xf32>
    %110 = arith.subf %109, %103 : vector<2x32xf32>
    %111 = arith.mulf %110, %108 : vector<2x32xf32>
    %112 = arith.mulf %103, %89 : vector<2x32xf32>
    %113 = arith.addf %111, %112 : vector<2x32xf32>
    %c6 = arith.constant 6 : index
    %c0_33 = arith.constant 0 : index
    %114 = vector.load %arg12[%c6, %c0_33] : memref<16x32xf32, #tpu.memory_space<vmem>>, vector<2x32xf32>
    tpu.vector_store %arg12[%c6, %c0_33], %113 {strides = array<i32>} : memref<16x32xf32, #tpu.memory_space<vmem>>, vector<2x32xf32>,
    %115 = vector.extract_strided_slice %17 {offsets = [8, 0], sizes = [2, 96], strides = [1, 1]} : vector<16x96xf32> to vector<2x96xf32>
    %cst_34 = arith.constant dense<0.000000e+00> : vector<2x96xf32>
    %116 = tpu.matmul %113, %0, %cst_34 {dimension_numbers = #tpu.dot_dimension_numbers<[1], [0], [0], [1], [0, 0, 1, 1], [], []>} : vector<2x32xf32>, vector<32x96xf32>, vector<2x96xf32> -> vector<2x96xf32>
    %117 = arith.addf %116, %6 : vector<2x96xf32>
    %118 = vector.extract_strided_slice %115 {offsets = [0, 0], sizes = [2, 64], strides = [1, 1]} : vector<2x96xf32> to vector<2x64xf32>
    %119 = vector.extract_strided_slice %117 {offsets = [0, 0], sizes = [2, 64], strides = [1, 1]} : vector<2x96xf32> to vector<2x64xf32>
    %120 = arith.addf %118, %119 : vector<2x64xf32>
    %121 = arith.negf %120 : vector<2x64xf32>
    %122 = math.exp %121 : vector<2x64xf32>
    %cst_35 = arith.constant 1.000000e+00 : f32
    %123 = vector.broadcast %cst_35 : f32 to vector<2x64xf32>
    %124 = arith.addf %123, %122 : vector<2x64xf32>
    %125 = arith.divf %123, %124 : vector<2x64xf32>
    %126 = vector.extract_strided_slice %125 {offsets = [0, 0], sizes = [2, 32], strides = [1, 1]} : vector<2x64xf32> to vector<2x32xf32>
    %127 = vector.extract_strided_slice %125 {offsets = [0, 32], sizes = [2, 32], strides = [1, 1]} : vector<2x64xf32> to vector<2x32xf32>
    %128 = vector.extract_strided_slice %115 {offsets = [0, 64], sizes = [2, 32], strides = [1, 1]} : vector<2x96xf32> to vector<2x32xf32>
    %129 = vector.extract_strided_slice %117 {offsets = [0, 64], sizes = [2, 32], strides = [1, 1]} : vector<2x96xf32> to vector<2x32xf32>
    %130 = arith.mulf %126, %129 : vector<2x32xf32>
    %131 = arith.addf %128, %130 : vector<2x32xf32>
    %132 = math.tanh %131 : vector<2x32xf32>
    %cst_36 = arith.constant 1.000000e+00 : f32
    %133 = vector.broadcast %cst_36 : f32 to vector<2x32xf32>
    %134 = arith.subf %133, %127 : vector<2x32xf32>
    %135 = arith.mulf %134, %132 : vector<2x32xf32>
    %136 = arith.mulf %127, %113 : vector<2x32xf32>
    %137 = arith.addf %135, %136 : vector<2x32xf32>
    %c8 = arith.constant 8 : index
    %c0_37 = arith.constant 0 : index
    %138 = vector.load %arg12[%c8, %c0_37] : memref<16x32xf32, #tpu.memory_space<vmem>>, vector<2x32xf32>
    tpu.vector_store %arg12[%c8, %c0_37], %137 {strides = array<i32>} : memref<16x32xf32, #tpu.memory_space<vmem>>, vector<2x32xf32>,
    %139 = vector.extract_strided_slice %17 {offsets = [10, 0], sizes = [2, 96], strides = [1, 1]} : vector<16x96xf32> to vector<2x96xf32>
    %cst_38 = arith.constant dense<0.000000e+00> : vector<2x96xf32>
    %140 = tpu.matmul %137, %0, %cst_38 {dimension_numbers = #tpu.dot_dimension_numbers<[1], [0], [0], [1], [0, 0, 1, 1], [], []>} : vector<2x32xf32>, vector<32x96xf32>, vector<2x96xf32> -> vector<2x96xf32>
    %141 = arith.addf %140, %6 : vector<2x96xf32>
    %142 = vector.extract_strided_slice %139 {offsets = [0, 0], sizes = [2, 64], strides = [1, 1]} : vector<2x96xf32> to vector<2x64xf32>
    %143 = vector.extract_strided_slice %141 {offsets = [0, 0], sizes = [2, 64], strides = [1, 1]} : vector<2x96xf32> to vector<2x64xf32>
    %144 = arith.addf %142, %143 : vector<2x64xf32>
    %145 = arith.negf %144 : vector<2x64xf32>
    %146 = math.exp %145 : vector<2x64xf32>
    %cst_39 = arith.constant 1.000000e+00 : f32
    %147 = vector.broadcast %cst_39 : f32 to vector<2x64xf32>
    %148 = arith.addf %147, %146 : vector<2x64xf32>
    %149 = arith.divf %147, %148 : vector<2x64xf32>
    %150 = vector.extract_strided_slice %149 {offsets = [0, 0], sizes = [2, 32], strides = [1, 1]} : vector<2x64xf32> to vector<2x32xf32>
    %151 = vector.extract_strided_slice %149 {offsets = [0, 32], sizes = [2, 32], strides = [1, 1]} : vector<2x64xf32> to vector<2x32xf32>
    %152 = vector.extract_strided_slice %139 {offsets = [0, 64], sizes = [2, 32], strides = [1, 1]} : vector<2x96xf32> to vector<2x32xf32>
    %153 = vector.extract_strided_slice %141 {offsets = [0, 64], sizes = [2, 32], strides = [1, 1]} : vector<2x96xf32> to vector<2x32xf32>
    %154 = arith.mulf %150, %153 : vector<2x32xf32>
    %155 = arith.addf %152, %154 : vector<2x32xf32>
    %156 = math.tanh %155 : vector<2x32xf32>
    %cst_40 = arith.constant 1.000000e+00 : f32
    %157 = vector.broadcast %cst_40 : f32 to vector<2x32xf32>
    %158 = arith.subf %157, %151 : vector<2x32xf32>
    %159 = arith.mulf %158, %156 : vector<2x32xf32>
    %160 = arith.mulf %151, %137 : vector<2x32xf32>
    %161 = arith.addf %159, %160 : vector<2x32xf32>
    %c10 = arith.constant 10 : index
    %c0_41 = arith.constant 0 : index
    %162 = vector.load %arg12[%c10, %c0_41] : memref<16x32xf32, #tpu.memory_space<vmem>>, vector<2x32xf32>
    tpu.vector_store %arg12[%c10, %c0_41], %161 {strides = array<i32>} : memref<16x32xf32, #tpu.memory_space<vmem>>, vector<2x32xf32>,
    %163 = vector.extract_strided_slice %17 {offsets = [12, 0], sizes = [2, 96], strides = [1, 1]} : vector<16x96xf32> to vector<2x96xf32>
    %cst_42 = arith.constant dense<0.000000e+00> : vector<2x96xf32>
    %164 = tpu.matmul %161, %0, %cst_42 {dimension_numbers = #tpu.dot_dimension_numbers<[1], [0], [0], [1], [0, 0, 1, 1], [], []>} : vector<2x32xf32>, vector<32x96xf32>, vector<2x96xf32> -> vector<2x96xf32>
    %165 = arith.addf %164, %6 : vector<2x96xf32>
    %166 = vector.extract_strided_slice %163 {offsets = [0, 0], sizes = [2, 64], strides = [1, 1]} : vector<2x96xf32> to vector<2x64xf32>
    %167 = vector.extract_strided_slice %165 {offsets = [0, 0], sizes = [2, 64], strides = [1, 1]} : vector<2x96xf32> to vector<2x64xf32>
    %168 = arith.addf %166, %167 : vector<2x64xf32>
    %169 = arith.negf %168 : vector<2x64xf32>
    %170 = math.exp %169 : vector<2x64xf32>
    %cst_43 = arith.constant 1.000000e+00 : f32
    %171 = vector.broadcast %cst_43 : f32 to vector<2x64xf32>
    %172 = arith.addf %171, %170 : vector<2x64xf32>
    %173 = arith.divf %171, %172 : vector<2x64xf32>
    %174 = vector.extract_strided_slice %173 {offsets = [0, 0], sizes = [2, 32], strides = [1, 1]} : vector<2x64xf32> to vector<2x32xf32>
    %175 = vector.extract_strided_slice %173 {offsets = [0, 32], sizes = [2, 32], strides = [1, 1]} : vector<2x64xf32> to vector<2x32xf32>
    %176 = vector.extract_strided_slice %163 {offsets = [0, 64], sizes = [2, 32], strides = [1, 1]} : vector<2x96xf32> to vector<2x32xf32>
    %177 = vector.extract_strided_slice %165 {offsets = [0, 64], sizes = [2, 32], strides = [1, 1]} : vector<2x96xf32> to vector<2x32xf32>
    %178 = arith.mulf %174, %177 : vector<2x32xf32>
    %179 = arith.addf %176, %178 : vector<2x32xf32>
    %180 = math.tanh %179 : vector<2x32xf32>
    %cst_44 = arith.constant 1.000000e+00 : f32
    %181 = vector.broadcast %cst_44 : f32 to vector<2x32xf32>
    %182 = arith.subf %181, %175 : vector<2x32xf32>
    %183 = arith.mulf %182, %180 : vector<2x32xf32>
    %184 = arith.mulf %175, %161 : vector<2x32xf32>
    %185 = arith.addf %183, %184 : vector<2x32xf32>
    %c12 = arith.constant 12 : index
    %c0_45 = arith.constant 0 : index
    %186 = vector.load %arg12[%c12, %c0_45] : memref<16x32xf32, #tpu.memory_space<vmem>>, vector<2x32xf32>
    tpu.vector_store %arg12[%c12, %c0_45], %185 {strides = array<i32>} : memref<16x32xf32, #tpu.memory_space<vmem>>, vector<2x32xf32>,
    %187 = vector.extract_strided_slice %17 {offsets = [14, 0], sizes = [2, 96], strides = [1, 1]} : vector<16x96xf32> to vector<2x96xf32>
    %cst_46 = arith.constant dense<0.000000e+00> : vector<2x96xf32>
    %188 = tpu.matmul %185, %0, %cst_46 {dimension_numbers = #tpu.dot_dimension_numbers<[1], [0], [0], [1], [0, 0, 1, 1], [], []>} : vector<2x32xf32>, vector<32x96xf32>, vector<2x96xf32> -> vector<2x96xf32>
    %189 = arith.addf %188, %6 : vector<2x96xf32>
    %190 = vector.extract_strided_slice %187 {offsets = [0, 0], sizes = [2, 64], strides = [1, 1]} : vector<2x96xf32> to vector<2x64xf32>
    %191 = vector.extract_strided_slice %189 {offsets = [0, 0], sizes = [2, 64], strides = [1, 1]} : vector<2x96xf32> to vector<2x64xf32>
    %192 = arith.addf %190, %191 : vector<2x64xf32>
    %193 = arith.negf %192 : vector<2x64xf32>
    %194 = math.exp %193 : vector<2x64xf32>
    %cst_47 = arith.constant 1.000000e+00 : f32
    %195 = vector.broadcast %cst_47 : f32 to vector<2x64xf32>
    %196 = arith.addf %195, %194 : vector<2x64xf32>
    %197 = arith.divf %195, %196 : vector<2x64xf32>
    %198 = vector.extract_strided_slice %197 {offsets = [0, 0], sizes = [2, 32], strides = [1, 1]} : vector<2x64xf32> to vector<2x32xf32>
    %199 = vector.extract_strided_slice %197 {offsets = [0, 32], sizes = [2, 32], strides = [1, 1]} : vector<2x64xf32> to vector<2x32xf32>
    %200 = vector.extract_strided_slice %187 {offsets = [0, 64], sizes = [2, 32], strides = [1, 1]} : vector<2x96xf32> to vector<2x32xf32>
    %201 = vector.extract_strided_slice %189 {offsets = [0, 64], sizes = [2, 32], strides = [1, 1]} : vector<2x96xf32> to vector<2x32xf32>
    %202 = arith.mulf %198, %201 : vector<2x32xf32>
    %203 = arith.addf %200, %202 : vector<2x32xf32>
    %204 = math.tanh %203 : vector<2x32xf32>
    %cst_48 = arith.constant 1.000000e+00 : f32
    %205 = vector.broadcast %cst_48 : f32 to vector<2x32xf32>
    %206 = arith.subf %205, %199 : vector<2x32xf32>
    %207 = arith.mulf %206, %204 : vector<2x32xf32>
    %208 = arith.mulf %199, %185 : vector<2x32xf32>
    %209 = arith.addf %207, %208 : vector<2x32xf32>
    %c14 = arith.constant 14 : index
    %c0_49 = arith.constant 0 : index
    %210 = vector.load %arg12[%c14, %c0_49] : memref<16x32xf32, #tpu.memory_space<vmem>>, vector<2x32xf32>
    tpu.vector_store %arg12[%c14, %c0_49], %209 {strides = array<i32>} : memref<16x32xf32, #tpu.memory_space<vmem>>, vector<2x32xf32>,
    %c0_50 = arith.constant 0 : index
    %c0_51 = arith.constant 0 : index
    %211 = vector.load %arg12[%c0_50, %c0_51] : memref<16x32xf32, #tpu.memory_space<vmem>>, vector<16x32xf32>
    %cst_52 = arith.constant dense<0.000000e+00> : vector<16x96xf32>
    %212 = tpu.matmul %211, %2, %cst_52 {dimension_numbers = #tpu.dot_dimension_numbers<[1], [0], [0], [1], [0, 0, 1, 1], [], []>} : vector<16x32xf32>, vector<32x96xf32>, vector<16x96xf32> -> vector<16x96xf32>
    %213 = vector.broadcast %3 : vector<1x96xf32> to vector<16x96xf32>
    %214 = arith.addf %212, %213 : vector<16x96xf32>
    %cst_53 = arith.constant 0.000000e+00 : f32
    %215 = vector.broadcast %cst_53 : f32 to vector<2x32xf32>
    %216 = vector.extract_strided_slice %214 {offsets = [0, 0], sizes = [2, 96], strides = [1, 1]} : vector<16x96xf32> to vector<2x96xf32>
    %cst_54 = arith.constant dense<0.000000e+00> : vector<2x96xf32>
    %217 = tpu.matmul %215, %1, %cst_54 {dimension_numbers = #tpu.dot_dimension_numbers<[1], [0], [0], [1], [0, 0, 1, 1], [], []>} : vector<2x32xf32>, vector<32x96xf32>, vector<2x96xf32> -> vector<2x96xf32>
    %218 = arith.addf %217, %9 : vector<2x96xf32>
    %219 = vector.extract_strided_slice %216 {offsets = [0, 0], sizes = [2, 64], strides = [1, 1]} : vector<2x96xf32> to vector<2x64xf32>
    %220 = vector.extract_strided_slice %218 {offsets = [0, 0], sizes = [2, 64], strides = [1, 1]} : vector<2x96xf32> to vector<2x64xf32>
    %221 = arith.addf %219, %220 : vector<2x64xf32>
    %222 = arith.negf %221 : vector<2x64xf32>
    %223 = math.exp %222 : vector<2x64xf32>
    %cst_55 = arith.constant 1.000000e+00 : f32
    %224 = vector.broadcast %cst_55 : f32 to vector<2x64xf32>
    %225 = arith.addf %224, %223 : vector<2x64xf32>
    %226 = arith.divf %224, %225 : vector<2x64xf32>
    %227 = vector.extract_strided_slice %226 {offsets = [0, 0], sizes = [2, 32], strides = [1, 1]} : vector<2x64xf32> to vector<2x32xf32>
    %228 = vector.extract_strided_slice %226 {offsets = [0, 32], sizes = [2, 32], strides = [1, 1]} : vector<2x64xf32> to vector<2x32xf32>
    %229 = vector.extract_strided_slice %216 {offsets = [0, 64], sizes = [2, 32], strides = [1, 1]} : vector<2x96xf32> to vector<2x32xf32>
    %230 = vector.extract_strided_slice %218 {offsets = [0, 64], sizes = [2, 32], strides = [1, 1]} : vector<2x96xf32> to vector<2x32xf32>
    %231 = arith.mulf %227, %230 : vector<2x32xf32>
    %232 = arith.addf %229, %231 : vector<2x32xf32>
    %233 = math.tanh %232 : vector<2x32xf32>
    %cst_56 = arith.constant 1.000000e+00 : f32
    %234 = vector.broadcast %cst_56 : f32 to vector<2x32xf32>
    %235 = arith.subf %234, %228 : vector<2x32xf32>
    %236 = arith.mulf %235, %233 : vector<2x32xf32>
    %237 = arith.mulf %228, %215 : vector<2x32xf32>
    %238 = arith.addf %236, %237 : vector<2x32xf32>
    %239 = vector.extract_strided_slice %214 {offsets = [2, 0], sizes = [2, 96], strides = [1, 1]} : vector<16x96xf32> to vector<2x96xf32>
    %cst_57 = arith.constant dense<0.000000e+00> : vector<2x96xf32>
    %240 = tpu.matmul %238, %1, %cst_57 {dimension_numbers = #tpu.dot_dimension_numbers<[1], [0], [0], [1], [0, 0, 1, 1], [], []>} : vector<2x32xf32>, vector<32x96xf32>, vector<2x96xf32> -> vector<2x96xf32>
    %241 = arith.addf %240, %9 : vector<2x96xf32>
    %242 = vector.extract_strided_slice %239 {offsets = [0, 0], sizes = [2, 64], strides = [1, 1]} : vector<2x96xf32> to vector<2x64xf32>
    %243 = vector.extract_strided_slice %241 {offsets = [0, 0], sizes = [2, 64], strides = [1, 1]} : vector<2x96xf32> to vector<2x64xf32>
    %244 = arith.addf %242, %243 : vector<2x64xf32>
    %245 = arith.negf %244 : vector<2x64xf32>
    %246 = math.exp %245 : vector<2x64xf32>
    %cst_58 = arith.constant 1.000000e+00 : f32
    %247 = vector.broadcast %cst_58 : f32 to vector<2x64xf32>
    %248 = arith.addf %247, %246 : vector<2x64xf32>
    %249 = arith.divf %247, %248 : vector<2x64xf32>
    %250 = vector.extract_strided_slice %249 {offsets = [0, 0], sizes = [2, 32], strides = [1, 1]} : vector<2x64xf32> to vector<2x32xf32>
    %251 = vector.extract_strided_slice %249 {offsets = [0, 32], sizes = [2, 32], strides = [1, 1]} : vector<2x64xf32> to vector<2x32xf32>
    %252 = vector.extract_strided_slice %239 {offsets = [0, 64], sizes = [2, 32], strides = [1, 1]} : vector<2x96xf32> to vector<2x32xf32>
    %253 = vector.extract_strided_slice %241 {offsets = [0, 64], sizes = [2, 32], strides = [1, 1]} : vector<2x96xf32> to vector<2x32xf32>
    %254 = arith.mulf %250, %253 : vector<2x32xf32>
    %255 = arith.addf %252, %254 : vector<2x32xf32>
    %256 = math.tanh %255 : vector<2x32xf32>
    %cst_59 = arith.constant 1.000000e+00 : f32
    %257 = vector.broadcast %cst_59 : f32 to vector<2x32xf32>
    %258 = arith.subf %257, %251 : vector<2x32xf32>
    %259 = arith.mulf %258, %256 : vector<2x32xf32>
    %260 = arith.mulf %251, %238 : vector<2x32xf32>
    %261 = arith.addf %259, %260 : vector<2x32xf32>
    %262 = vector.extract_strided_slice %214 {offsets = [4, 0], sizes = [2, 96], strides = [1, 1]} : vector<16x96xf32> to vector<2x96xf32>
    %cst_60 = arith.constant dense<0.000000e+00> : vector<2x96xf32>
    %263 = tpu.matmul %261, %1, %cst_60 {dimension_numbers = #tpu.dot_dimension_numbers<[1], [0], [0], [1], [0, 0, 1, 1], [], []>} : vector<2x32xf32>, vector<32x96xf32>, vector<2x96xf32> -> vector<2x96xf32>
    %264 = arith.addf %263, %9 : vector<2x96xf32>
    %265 = vector.extract_strided_slice %262 {offsets = [0, 0], sizes = [2, 64], strides = [1, 1]} : vector<2x96xf32> to vector<2x64xf32>
    %266 = vector.extract_strided_slice %264 {offsets = [0, 0], sizes = [2, 64], strides = [1, 1]} : vector<2x96xf32> to vector<2x64xf32>
    %267 = arith.addf %265, %266 : vector<2x64xf32>
    %268 = arith.negf %267 : vector<2x64xf32>
    %269 = math.exp %268 : vector<2x64xf32>
    %cst_61 = arith.constant 1.000000e+00 : f32
    %270 = vector.broadcast %cst_61 : f32 to vector<2x64xf32>
    %271 = arith.addf %270, %269 : vector<2x64xf32>
    %272 = arith.divf %270, %271 : vector<2x64xf32>
    %273 = vector.extract_strided_slice %272 {offsets = [0, 0], sizes = [2, 32], strides = [1, 1]} : vector<2x64xf32> to vector<2x32xf32>
    %274 = vector.extract_strided_slice %272 {offsets = [0, 32], sizes = [2, 32], strides = [1, 1]} : vector<2x64xf32> to vector<2x32xf32>
    %275 = vector.extract_strided_slice %262 {offsets = [0, 64], sizes = [2, 32], strides = [1, 1]} : vector<2x96xf32> to vector<2x32xf32>
    %276 = vector.extract_strided_slice %264 {offsets = [0, 64], sizes = [2, 32], strides = [1, 1]} : vector<2x96xf32> to vector<2x32xf32>
    %277 = arith.mulf %273, %276 : vector<2x32xf32>
    %278 = arith.addf %275, %277 : vector<2x32xf32>
    %279 = math.tanh %278 : vector<2x32xf32>
    %cst_62 = arith.constant 1.000000e+00 : f32
    %280 = vector.broadcast %cst_62 : f32 to vector<2x32xf32>
    %281 = arith.subf %280, %274 : vector<2x32xf32>
    %282 = arith.mulf %281, %279 : vector<2x32xf32>
    %283 = arith.mulf %274, %261 : vector<2x32xf32>
    %284 = arith.addf %282, %283 : vector<2x32xf32>
    %285 = vector.extract_strided_slice %214 {offsets = [6, 0], sizes = [2, 96], strides = [1, 1]} : vector<16x96xf32> to vector<2x96xf32>
    %cst_63 = arith.constant dense<0.000000e+00> : vector<2x96xf32>
    %286 = tpu.matmul %284, %1, %cst_63 {dimension_numbers = #tpu.dot_dimension_numbers<[1], [0], [0], [1], [0, 0, 1, 1], [], []>} : vector<2x32xf32>, vector<32x96xf32>, vector<2x96xf32> -> vector<2x96xf32>
    %287 = arith.addf %286, %9 : vector<2x96xf32>
    %288 = vector.extract_strided_slice %285 {offsets = [0, 0], sizes = [2, 64], strides = [1, 1]} : vector<2x96xf32> to vector<2x64xf32>
    %289 = vector.extract_strided_slice %287 {offsets = [0, 0], sizes = [2, 64], strides = [1, 1]} : vector<2x96xf32> to vector<2x64xf32>
    %290 = arith.addf %288, %289 : vector<2x64xf32>
    %291 = arith.negf %290 : vector<2x64xf32>
    %292 = math.exp %291 : vector<2x64xf32>
    %cst_64 = arith.constant 1.000000e+00 : f32
    %293 = vector.broadcast %cst_64 : f32 to vector<2x64xf32>
    %294 = arith.addf %293, %292 : vector<2x64xf32>
    %295 = arith.divf %293, %294 : vector<2x64xf32>
    %296 = vector.extract_strided_slice %295 {offsets = [0, 0], sizes = [2, 32], strides = [1, 1]} : vector<2x64xf32> to vector<2x32xf32>
    %297 = vector.extract_strided_slice %295 {offsets = [0, 32], sizes = [2, 32], strides = [1, 1]} : vector<2x64xf32> to vector<2x32xf32>
    %298 = vector.extract_strided_slice %285 {offsets = [0, 64], sizes = [2, 32], strides = [1, 1]} : vector<2x96xf32> to vector<2x32xf32>
    %299 = vector.extract_strided_slice %287 {offsets = [0, 64], sizes = [2, 32], strides = [1, 1]} : vector<2x96xf32> to vector<2x32xf32>
    %300 = arith.mulf %296, %299 : vector<2x32xf32>
    %301 = arith.addf %298, %300 : vector<2x32xf32>
    %302 = math.tanh %301 : vector<2x32xf32>
    %cst_65 = arith.constant 1.000000e+00 : f32
    %303 = vector.broadcast %cst_65 : f32 to vector<2x32xf32>
    %304 = arith.subf %303, %297 : vector<2x32xf32>
    %305 = arith.mulf %304, %302 : vector<2x32xf32>
    %306 = arith.mulf %297, %284 : vector<2x32xf32>
    %307 = arith.addf %305, %306 : vector<2x32xf32>
    %308 = vector.extract_strided_slice %214 {offsets = [8, 0], sizes = [2, 96], strides = [1, 1]} : vector<16x96xf32> to vector<2x96xf32>
    %cst_66 = arith.constant dense<0.000000e+00> : vector<2x96xf32>
    %309 = tpu.matmul %307, %1, %cst_66 {dimension_numbers = #tpu.dot_dimension_numbers<[1], [0], [0], [1], [0, 0, 1, 1], [], []>} : vector<2x32xf32>, vector<32x96xf32>, vector<2x96xf32> -> vector<2x96xf32>
    %310 = arith.addf %309, %9 : vector<2x96xf32>
    %311 = vector.extract_strided_slice %308 {offsets = [0, 0], sizes = [2, 64], strides = [1, 1]} : vector<2x96xf32> to vector<2x64xf32>
    %312 = vector.extract_strided_slice %310 {offsets = [0, 0], sizes = [2, 64], strides = [1, 1]} : vector<2x96xf32> to vector<2x64xf32>
    %313 = arith.addf %311, %312 : vector<2x64xf32>
    %314 = arith.negf %313 : vector<2x64xf32>
    %315 = math.exp %314 : vector<2x64xf32>
    %cst_67 = arith.constant 1.000000e+00 : f32
    %316 = vector.broadcast %cst_67 : f32 to vector<2x64xf32>
    %317 = arith.addf %316, %315 : vector<2x64xf32>
    %318 = arith.divf %316, %317 : vector<2x64xf32>
    %319 = vector.extract_strided_slice %318 {offsets = [0, 0], sizes = [2, 32], strides = [1, 1]} : vector<2x64xf32> to vector<2x32xf32>
    %320 = vector.extract_strided_slice %318 {offsets = [0, 32], sizes = [2, 32], strides = [1, 1]} : vector<2x64xf32> to vector<2x32xf32>
    %321 = vector.extract_strided_slice %308 {offsets = [0, 64], sizes = [2, 32], strides = [1, 1]} : vector<2x96xf32> to vector<2x32xf32>
    %322 = vector.extract_strided_slice %310 {offsets = [0, 64], sizes = [2, 32], strides = [1, 1]} : vector<2x96xf32> to vector<2x32xf32>
    %323 = arith.mulf %319, %322 : vector<2x32xf32>
    %324 = arith.addf %321, %323 : vector<2x32xf32>
    %325 = math.tanh %324 : vector<2x32xf32>
    %cst_68 = arith.constant 1.000000e+00 : f32
    %326 = vector.broadcast %cst_68 : f32 to vector<2x32xf32>
    %327 = arith.subf %326, %320 : vector<2x32xf32>
    %328 = arith.mulf %327, %325 : vector<2x32xf32>
    %329 = arith.mulf %320, %307 : vector<2x32xf32>
    %330 = arith.addf %328, %329 : vector<2x32xf32>
    %331 = vector.extract_strided_slice %214 {offsets = [10, 0], sizes = [2, 96], strides = [1, 1]} : vector<16x96xf32> to vector<2x96xf32>
    %cst_69 = arith.constant dense<0.000000e+00> : vector<2x96xf32>
    %332 = tpu.matmul %330, %1, %cst_69 {dimension_numbers = #tpu.dot_dimension_numbers<[1], [0], [0], [1], [0, 0, 1, 1], [], []>} : vector<2x32xf32>, vector<32x96xf32>, vector<2x96xf32> -> vector<2x96xf32>
    %333 = arith.addf %332, %9 : vector<2x96xf32>
    %334 = vector.extract_strided_slice %331 {offsets = [0, 0], sizes = [2, 64], strides = [1, 1]} : vector<2x96xf32> to vector<2x64xf32>
    %335 = vector.extract_strided_slice %333 {offsets = [0, 0], sizes = [2, 64], strides = [1, 1]} : vector<2x96xf32> to vector<2x64xf32>
    %336 = arith.addf %334, %335 : vector<2x64xf32>
    %337 = arith.negf %336 : vector<2x64xf32>
    %338 = math.exp %337 : vector<2x64xf32>
    %cst_70 = arith.constant 1.000000e+00 : f32
    %339 = vector.broadcast %cst_70 : f32 to vector<2x64xf32>
    %340 = arith.addf %339, %338 : vector<2x64xf32>
    %341 = arith.divf %339, %340 : vector<2x64xf32>
    %342 = vector.extract_strided_slice %341 {offsets = [0, 0], sizes = [2, 32], strides = [1, 1]} : vector<2x64xf32> to vector<2x32xf32>
    %343 = vector.extract_strided_slice %341 {offsets = [0, 32], sizes = [2, 32], strides = [1, 1]} : vector<2x64xf32> to vector<2x32xf32>
    %344 = vector.extract_strided_slice %331 {offsets = [0, 64], sizes = [2, 32], strides = [1, 1]} : vector<2x96xf32> to vector<2x32xf32>
    %345 = vector.extract_strided_slice %333 {offsets = [0, 64], sizes = [2, 32], strides = [1, 1]} : vector<2x96xf32> to vector<2x32xf32>
    %346 = arith.mulf %342, %345 : vector<2x32xf32>
    %347 = arith.addf %344, %346 : vector<2x32xf32>
    %348 = math.tanh %347 : vector<2x32xf32>
    %cst_71 = arith.constant 1.000000e+00 : f32
    %349 = vector.broadcast %cst_71 : f32 to vector<2x32xf32>
    %350 = arith.subf %349, %343 : vector<2x32xf32>
    %351 = arith.mulf %350, %348 : vector<2x32xf32>
    %352 = arith.mulf %343, %330 : vector<2x32xf32>
    %353 = arith.addf %351, %352 : vector<2x32xf32>
    %354 = vector.extract_strided_slice %214 {offsets = [12, 0], sizes = [2, 96], strides = [1, 1]} : vector<16x96xf32> to vector<2x96xf32>
    %cst_72 = arith.constant dense<0.000000e+00> : vector<2x96xf32>
    %355 = tpu.matmul %353, %1, %cst_72 {dimension_numbers = #tpu.dot_dimension_numbers<[1], [0], [0], [1], [0, 0, 1, 1], [], []>} : vector<2x32xf32>, vector<32x96xf32>, vector<2x96xf32> -> vector<2x96xf32>
    %356 = arith.addf %355, %9 : vector<2x96xf32>
    %357 = vector.extract_strided_slice %354 {offsets = [0, 0], sizes = [2, 64], strides = [1, 1]} : vector<2x96xf32> to vector<2x64xf32>
    %358 = vector.extract_strided_slice %356 {offsets = [0, 0], sizes = [2, 64], strides = [1, 1]} : vector<2x96xf32> to vector<2x64xf32>
    %359 = arith.addf %357, %358 : vector<2x64xf32>
    %360 = arith.negf %359 : vector<2x64xf32>
    %361 = math.exp %360 : vector<2x64xf32>
    %cst_73 = arith.constant 1.000000e+00 : f32
    %362 = vector.broadcast %cst_73 : f32 to vector<2x64xf32>
    %363 = arith.addf %362, %361 : vector<2x64xf32>
    %364 = arith.divf %362, %363 : vector<2x64xf32>
    %365 = vector.extract_strided_slice %364 {offsets = [0, 0], sizes = [2, 32], strides = [1, 1]} : vector<2x64xf32> to vector<2x32xf32>
    %366 = vector.extract_strided_slice %364 {offsets = [0, 32], sizes = [2, 32], strides = [1, 1]} : vector<2x64xf32> to vector<2x32xf32>
    %367 = vector.extract_strided_slice %354 {offsets = [0, 64], sizes = [2, 32], strides = [1, 1]} : vector<2x96xf32> to vector<2x32xf32>
    %368 = vector.extract_strided_slice %356 {offsets = [0, 64], sizes = [2, 32], strides = [1, 1]} : vector<2x96xf32> to vector<2x32xf32>
    %369 = arith.mulf %365, %368 : vector<2x32xf32>
    %370 = arith.addf %367, %369 : vector<2x32xf32>
    %371 = math.tanh %370 : vector<2x32xf32>
    %cst_74 = arith.constant 1.000000e+00 : f32
    %372 = vector.broadcast %cst_74 : f32 to vector<2x32xf32>
    %373 = arith.subf %372, %366 : vector<2x32xf32>
    %374 = arith.mulf %373, %371 : vector<2x32xf32>
    %375 = arith.mulf %366, %353 : vector<2x32xf32>
    %376 = arith.addf %374, %375 : vector<2x32xf32>
    %377 = vector.extract_strided_slice %214 {offsets = [14, 0], sizes = [2, 96], strides = [1, 1]} : vector<16x96xf32> to vector<2x96xf32>
    %cst_75 = arith.constant dense<0.000000e+00> : vector<2x96xf32>
    %378 = tpu.matmul %376, %1, %cst_75 {dimension_numbers = #tpu.dot_dimension_numbers<[1], [0], [0], [1], [0, 0, 1, 1], [], []>} : vector<2x32xf32>, vector<32x96xf32>, vector<2x96xf32> -> vector<2x96xf32>
    %379 = arith.addf %378, %9 : vector<2x96xf32>
    %380 = vector.extract_strided_slice %377 {offsets = [0, 0], sizes = [2, 64], strides = [1, 1]} : vector<2x96xf32> to vector<2x64xf32>
    %381 = vector.extract_strided_slice %379 {offsets = [0, 0], sizes = [2, 64], strides = [1, 1]} : vector<2x96xf32> to vector<2x64xf32>
    %382 = arith.addf %380, %381 : vector<2x64xf32>
    %383 = arith.negf %382 : vector<2x64xf32>
    %384 = math.exp %383 : vector<2x64xf32>
    %cst_76 = arith.constant 1.000000e+00 : f32
    %385 = vector.broadcast %cst_76 : f32 to vector<2x64xf32>
    %386 = arith.addf %385, %384 : vector<2x64xf32>
    %387 = arith.divf %385, %386 : vector<2x64xf32>
    %388 = vector.extract_strided_slice %387 {offsets = [0, 0], sizes = [2, 32], strides = [1, 1]} : vector<2x64xf32> to vector<2x32xf32>
    %389 = vector.extract_strided_slice %387 {offsets = [0, 32], sizes = [2, 32], strides = [1, 1]} : vector<2x64xf32> to vector<2x32xf32>
    %390 = vector.extract_strided_slice %377 {offsets = [0, 64], sizes = [2, 32], strides = [1, 1]} : vector<2x96xf32> to vector<2x32xf32>
    %391 = vector.extract_strided_slice %379 {offsets = [0, 64], sizes = [2, 32], strides = [1, 1]} : vector<2x96xf32> to vector<2x32xf32>
    %392 = arith.mulf %388, %391 : vector<2x32xf32>
    %393 = arith.addf %390, %392 : vector<2x32xf32>
    %394 = math.tanh %393 : vector<2x32xf32>
    %cst_77 = arith.constant 1.000000e+00 : f32
    %395 = vector.broadcast %cst_77 : f32 to vector<2x32xf32>
    %396 = arith.subf %395, %389 : vector<2x32xf32>
    %397 = arith.mulf %396, %394 : vector<2x32xf32>
    %398 = arith.mulf %389, %376 : vector<2x32xf32>
    %399 = arith.addf %397, %398 : vector<2x32xf32>
    %c0_78 = arith.constant 0 : index
    %c0_79 = arith.constant 0 : index
    %400 = vector.load %arg9[%c0_78, %c0_79] : memref<32x1xf32, #tpu.memory_space<vmem>>, vector<32x1xf32>
    %cst_80 = arith.constant dense<0.000000e+00> : vector<2x1xf32>
    %401 = tpu.matmul %399, %400, %cst_80 {dimension_numbers = #tpu.dot_dimension_numbers<[1], [0], [0], [1], [0, 0, 1, 1], [], []>} : vector<2x32xf32>, vector<32x1xf32>, vector<2x1xf32> -> vector<2x1xf32>
    %c0_81 = arith.constant 0 : index
    %c0_82 = arith.constant 0 : index
    %402 = vector.load %arg10[%c0_81, %c0_82] : memref<1x1xf32, #tpu.memory_space<vmem>>, vector<1x1xf32>
    %403 = vector.broadcast %402 : vector<1x1xf32> to vector<2x1xf32>
    %404 = arith.addf %401, %403 : vector<2x1xf32>
    %c0_83 = arith.constant 0 : index
    %c0_84 = arith.constant 0 : index
    %405 = vector.load %arg11[%c0_83, %c0_84] : memref<2x1xf32, #tpu.memory_space<vmem>>, vector<2x1xf32>
    tpu.vector_store %arg11[%c0_83, %c0_84], %404 {strides = array<i32>} : memref<2x1xf32, #tpu.memory_space<vmem>>, vector<2x1xf32>,
    return
  }
}

</mosaic_0001>

<llo_original>
// kernel: gru_forward.1
$region0: #{gru_forward.1}
  #allocation0 [shape = 'u32[]', space=smem, size = 0x4, offset = 0x4, fixed_abs, tag = 'smem constant byte address 0x4 - core index']
  #allocation1 [shape = 'u32[144,128]{1,0:T(1,128)}', space=vmem, size = 0x12000, scoped, tag = 'internal scratch']
  #allocation2 [shape = 'f32[16,32]{1,0:T(8,128)}', space=vmem, size = 0x2000, scoped, tag = 'scratch operand']
  #allocation3 [shape = 'f32[1,1]{1,0:T(1,128)S(1)}', space=vmem, size = 0x200, scoped, tag = 'scoped memory for gru_forward.1']
  %s0 = inlined_call_operand.vmem [shape: f32[16,1], index: 0, kind: input, shape index: {}]
  %s1 = inlined_call_operand.vmem [shape: f32[1,96], index: 1, kind: input, shape index: {}]
  %s2 = inlined_call_operand.vmem [shape: f32[32,96], index: 2, kind: input, shape index: {}]
  %s3 = inlined_call_operand.vmem [shape: f32[1,96], index: 3, kind: input, shape index: {}]
  %s4 = inlined_call_operand.vmem [shape: f32[1,96], index: 4, kind: input, shape index: {}]
  %s5 = inlined_call_operand.vmem [shape: f32[32,96], index: 5, kind: input, shape index: {}]
  %s6 = inlined_call_operand.hbm [shape: f32[32,96], index: 6, kind: input, shape index: {}]
  %s7 = inlined_call_operand.vmem [shape: f32[1,96], index: 7, kind: input, shape index: {}]
  %s8 = inlined_call_operand.vmem [shape: f32[1,96], index: 8, kind: input, shape index: {}]
  %s9 = inlined_call_operand.vmem [shape: f32[32,1], index: 9, kind: input, shape index: {}]
  %s10 = inlined_call_operand.<no memory space> [shape: f32[1,1], index: 10, kind: input, shape index: {}]
  %s11 = inlined_call_operand.vmem [shape: f32[2,1], index: 11, kind: output, shape index: {}]
  %s12 = sld [smem:[#allocation0]]
  $region58: #{gru_forward.1} parent=0
    _
  %s14 = ssub.s32 1, %s12
  %s15 = scalar_select 0, %s14, %s12
  %v16 = vstv %s10
  %17 = vst [vmem:[#allocation3] sm:$0x1] %v16
  $region1: #{gru_forward.1} parent=0
    #allocation4 [shape = 'u8[16384]{0}', space=vmem, size = 0x4000, scoped, tag = 'input window, operand 6, single buffered']
    #allocation5 [shape = 's32[1]{0}', space=sflag, size = 0x4, scoped, tag = 'scoped memory for gru_forward.1']
    %18 = vsyncpa [#allocation5], 0
    // Predicated region
    $region2: #{gru_forward.1} parent=1 // pred_check
      _
    $region3: #{gru_forward.1} parent=1 // pred_check_branch
      %20 = sbr.rel (0) target = $region5
    $region4: #{gru_forward.1} parent=1 // pred_region
      _
    $region5: #{gru_forward.1} parent=1 // pred_fallthru
      _
    // Predicated region
    $region6: #{gru_forward.1} parent=1 // pred_check
      _
    $region7: #{gru_forward.1} parent=1 // pred_check_branch
      %22 = sbr.rel (0) target = $region9
    $region8: #{gru_forward.1} parent=1 // pred_region
      _
    $region9: #{gru_forward.1} parent=1 // pred_fallthru
      _
    // Predicated region
    $region10: #{gru_forward.1} parent=1 // pred_check
      _
    $region11: #{gru_forward.1} parent=1 // pred_check_branch
      %24 = sbr.rel (0) target = $region13
    $region12: #{gru_forward.1} parent=1 // pred_region
      _
    $region13: #{gru_forward.1} parent=1 // pred_fallthru
      _
    // Predicated region
    $region14: #{gru_forward.1} parent=1 // pred_check
      _
    $region15: #{gru_forward.1} parent=1 // pred_check_branch
      %26 = sbr.rel (0) target = $region17
    $region16: #{gru_forward.1} parent=1 // pred_region
      _
    $region17: #{gru_forward.1} parent=1 // pred_fallthru
      _
    // Predicated region
    $region18: #{gru_forward.1} parent=1 // pred_check
      _
    $region19: #{gru_forward.1} parent=1 // pred_check_branch
      %28 = sbr.rel (0) target = $region21
    $region20: #{gru_forward.1} parent=1 // pred_region
      _
    $region21: #{gru_forward.1} parent=1 // pred_fallthru
      _
    // Predicated region
    $region22: #{gru_forward.1} parent=1 // pred_check
      _
    $region23: #{gru_forward.1} parent=1 // pred_check_branch
      %30 = sbr.rel (0) target = $region25
    $region24: #{gru_forward.1} parent=1 // pred_region
      _
    $region25: #{gru_forward.1} parent=1 // pred_fallthru
      _
    // Predicated region
    $region26: #{gru_forward.1} parent=1 // pred_check
      _
    $region27: #{gru_forward.1} parent=1 // pred_check_branch
      %32 = sbr.rel (0) target = $region29
    $region28: #{gru_forward.1} parent=1 // pred_region
      %s34 = ssub.s32 512, 512
      %35 = vsyncadd [#allocation5], %s34
      %s36 = sshll.u32 [#allocation4], 4
      %s37 = int_to_ptr.vmem [resolvable:$true] %s36
      %42 = dma.hbm_to_vmem [thread:$0]  %s6, 512, %s37, [#allocation5], 128, 128, 8
    $region29: #{gru_forward.1} parent=1 // pred_fallthru
      _
    // Predicated region
    $region30: #{gru_forward.1} parent=1 // pred_check
      _
    $region31: #{gru_forward.1} parent=1 // pred_check_branch
      %44 = sbr.rel (0) target = $region33
    $region32: #{gru_forward.1} parent=1 // pred_region
      _
    $region33: #{gru_forward.1} parent=1 // pred_fallthru
      _
    // Predicated region
    $region34: #{gru_forward.1} parent=1 // pred_check
      _
    $region35: #{gru_forward.1} parent=1 // pred_check_branch
      %46 = sbr.rel (0) target = $region37
    $region36: #{gru_forward.1} parent=1 // pred_region
      _
    $region37: #{gru_forward.1} parent=1 // pred_fallthru
      _
    // Predicated region
    $region38: #{gru_forward.1} parent=1 // pred_check
      _
    $region39: #{gru_forward.1} parent=1 // pred_check_branch
      %48 = sbr.rel (0) target = $region41
    $region40: #{gru_forward.1} parent=1 // pred_region
      _
    $region41: #{gru_forward.1} parent=1 // pred_fallthru
      _
    // Predicated region
    $region42: #{gru_forward.1} parent=1 // pred_check
      _
    $region43: #{gru_forward.1} parent=1 // pred_check_branch
      %50 = sbr.rel (0) target = $region45
    $region44: #{gru_forward.1} parent=1 // pred_region
      _
    $region45: #{gru_forward.1} parent=1 // pred_fallthru
      _
    // Predicated region
    $region46: #{gru_forward.1} parent=1 // pred_check
      _
    $region47: #{gru_forward.1} parent=1 // pred_check_branch
      %52 = sbr.rel (0) target = $region49
    $region48: #{gru_forward.1} parent=1 // pred_region
      %53 = dma.done [#allocation5], 512
    $region49: #{gru_forward.1} parent=1 // pred_fallthru
      _
    %v54 = vld [vmem:[%s2] sm:$0xff]
    %v55 = vld [vmem:[%s2 + $0x8] sm:$0xff]
    %v56 = vld [vmem:[%s2 + $0x10] sm:$0xff]
    %v57 = vld [vmem:[%s2 + $0x18] sm:$0xff]
    %v58 = vld [vmem:[#allocation4] sm:$0xff]
    %v59 = vld [vmem:[#allocation4 + $0x8] sm:$0xff]
    %v60 = vld [vmem:[#allocation4 + $0x10] sm:$0xff]
    %v61 = vld [vmem:[#allocation4 + $0x18] sm:$0xff]
    %v62 = vld [vmem:[%s5] sm:$0xff]
    %v63 = vld [vmem:[%s5 + $0x8] sm:$0xff]
    %v64 = vld [vmem:[%s5 + $0x10] sm:$0xff]
    %v65 = vld [vmem:[%s5 + $0x18] sm:$0xff]
    %v66 = vld [vmem:[%s7] sm:$0x1]
    %v67 = vld [vmem:[%s4] sm:$0x1]
    %v69 = vlaneseq
    %v70 = vshrl.u32 %v69, 7
    %v71 = vsub.s32 0, %v70
    %v72 = vrot.slane %v67, %v71
    %v74 = vld [vmem:[%s8] sm:$0x1]
    %v76 = vlaneseq
    %v77 = vshrl.u32 %v76, 7
    %v78 = vsub.s32 0, %v77
    %v79 = vrot.slane %v74, %v78
    %v81 = vld [vmem:[%s0] sm:$0xff]
    %v82 = vld [vmem:[%s0 + $0x8] sm:$0xff]
    %v83 = vld [vmem:[%s1] sm:$0x1]
    %85 = vset.pattern.permute.xlu0 0
    %86 = vperm.xlu0 %85, %v81
    %v87 = vpop.permute.xlu0 %86
    %90 = vset.pattern.permute.xlu0 0
    %91 = vperm.xlu0 %90, %v82
    %v92 = vpop.permute.xlu0 %91
    %v95 = vlaneseq
    %v96 = vshrl.u32 %v95, 7
    %v97 = vsub.s32 0, %v96
    %v98 = vrot.slane %v83, %v97
    %v100 = vmul.f32 %v87, %v98
    %v101 = vmul.f32 %v92, %v98
    %v102 = vld [vmem:[%s3] sm:$0x1]
    %v104 = vlaneseq
    %v105 = vshrl.u32 %v104, 7
    %v106 = vsub.s32 0, %v105
    %v107 = vrot.slane %v102, %v106
    %v109 = vadd.f32 %v100, %v107
    %v110 = vadd.f32 %v101, %v107
    %vm111 = vcmask 261120
    %v113 = vsel %vm111, 0.0, 0
    %115 = vmatprep.subr.mxu0 0.0
    %116 = vmatpush1.msra.mxu0 0.0
    %117 = vmatprep.subr.mxu0 0.0
    %118 = vmatpush1.msra.mxu0 0.0
    %119 = vmatprep.subr.mxu0 0.0
    %120 = vmatpush1.msra.mxu0 0.0
    %121 = vmatprep.subr.mxu0 0.0
    %122 = vmatpush1.msra.mxu0 0.0
    %123 = vmatprep.subr.mxu0 0.0
    %124 = vmatpush1.msra.mxu0 0.0
    %125 = vmatprep.subr.mxu0 0.0
    %126 = vmatpush1.msra.mxu0 0.0
    %127 = vmatprep.subr.mxu0 0.0
    %128 = vmatpush1.msra.mxu0 0.0
    %129 = vmatprep.subr.mxu0 0.0
    %130 = vmatpush1.msra.mxu0 0.0
    %131 = vmatprep.subr.mxu0 0.0
    %132 = vmatpush1.msra.mxu0 0.0
    %133 = vmatprep.subr.mxu0 0.0
    %134 = vmatpush1.msra.mxu0 0.0
    %135 = vmatprep.subr.mxu0 0.0
    %136 = vmatpush1.msra.mxu0 0.0
    %137 = vmatprep.subr.mxu0 0.0
    %138 = vmatpush1.msra.mxu0 0.0
    %139 = vmatprep.subr.mxu0 0.0
    %140 = vmatpush1.msra.mxu0 %v57
    %141 = vmatprep.subr.mxu0 0.0
    %142 = vmatpush1.msra.mxu0 %v56
    %143 = vmatprep.subr.mxu0 0.0
    %144 = vmatpush1.msra.mxu0 %v55
    %145 = vmatprep.subr.mxu0 0.0
    %146 = vmatpush1.msra.mxu0 %v54
    %147 = vmatprep.subr.mxu0 0.0
    %148 = vmatpush2.msra.mxu0 0.0
    %149 = vmatprep.subr.mxu0 0.0
    %150 = vmatpush2.msra.mxu0 0.0
    %151 = vmatprep.subr.mxu0 0.0
    %152 = vmatpush2.msra.mxu0 0.0
    %153 = vmatprep.subr.mxu0 0.0
    %154 = vmatpush2.msra.mxu0 0.0
    %155 = vmatprep.subr.mxu0 0.0
    %156 = vmatpush2.msra.mxu0 0.0
    %157 = vmatprep.subr.mxu0 0.0
    %158 = vmatpush2.msra.mxu0 0.0
    %159 = vmatprep.subr.mxu0 0.0
    %160 = vmatpush2.msra.mxu0 0.0
    %161 = vmatprep.subr.mxu0 0.0
    %162 = vmatpush2.msra.mxu0 0.0
    %163 = vmatprep.subr.mxu0 0.0
    %164 = vmatpush2.msra.mxu0 0.0
    %165 = vmatprep.subr.mxu0 0.0
    %166 = vmatpush2.msra.mxu0 0.0
    %167 = vmatprep.subr.mxu0 0.0
    %168 = vmatpush2.msra.mxu0 0.0
    %169 = vmatprep.subr.mxu0 0.0
    %170 = vmatpush2.msra.mxu0 0.0
    %171 = vmatprep.subr.mxu0 0.0
    %172 = vmatpush2.msra.mxu0 0.0
    %173 = vmatprep.subr.mxu0 0.0
    %174 = vmatpush2.msra.mxu0 0.0
    %175 = vmatprep.subr.mxu0 0.0
    %176 = vmatpush2.msra.mxu0 0.0
    %177 = vmatprep.subr.mxu0 0.0
    %178 = vmatpush2.msra.mxu0 0.0
    %179 = vmatprep.mubr.f32.mxu0 0.0
    %180 = vmatmul.mubr.f32.gmra.mxu0 %v113
    %v181 = vpop.f32.mrf.mxu0
    %v182 = vadd.f32 %v72, %v181
    %v183 = vpop.f32.mrf.mxu0
    %184 = vdwg.mxu0
    %v185 = vadd.f32 %v109, %v182
    %v186 = vxor.u32 %v185, 2147483648
    %v187 = vmul.f32 %v186, 1.442695
    %v188 = vpow.pop %v187
    %v189 = vadd.f32 %v188, 1.0
    %v190 = vrcp.pop %v189
    %v191 = vmul.f32 1.0, %v190
    %193 = vrot.lane.b32.xlu0 %v182, 64
    %v194 = vpop.permute.xlu0 %193
    %v196 = vmul.f32 %v191, %v194
    %198 = vrot.lane.b32.xlu0 %v196, 64
    %v199 = vpop.permute.xlu0 %198
    %v201 = vadd.f32 %v109, %v199
    %v202 = vtanh.pop %v201
    %v203 = vsub.f32 1.0, %v191
    %205 = vrot.lane.b32.xlu0 %v202, 96
    %v206 = vpop.permute.xlu0 %205
    %v208 = vmul.f32 %v203, %v206
    %v209 = vmul.f32 %v191, 0.0
    %v210 = vadd.f32 %v208, %v209
    %212 = vrot.lane.b32.xlu0 %v210, 96
    %v213 = vpop.permute.xlu0 %212
    %vm215 = vcmask 254976
    %216 = vst.msk [vmem:[#allocation2] sm:$0x3] %vm215, %v213
    %v217 = vsel %vm111, %v213, 0
    %219 = vmatprep.subr.mxu0 0.0
    %220 = vmatpush1.msra.mxu0 0.0
    %221 = vmatprep.subr.mxu0 0.0
    %222 = vmatpush1.msra.mxu0 0.0
    %223 = vmatprep.subr.mxu0 0.0
    %224 = vmatpush1.msra.mxu0 0.0
    %225 = vmatprep.subr.mxu0 0.0
    %226 = vmatpush1.msra.mxu0 0.0
    %227 = vmatprep.subr.mxu0 0.0
    %228 = vmatpush1.msra.mxu0 0.0
    %229 = vmatprep.subr.mxu0 0.0
    %230 = vmatpush1.msra.mxu0 0.0
    %231 = vmatprep.subr.mxu0 0.0
    %232 = vmatpush1.msra.mxu0 0.0
    %233 = vmatprep.subr.mxu0 0.0
    %234 = vmatpush1.msra.mxu0 0.0
    %235 = vmatprep.subr.mxu0 0.0
    %236 = vmatpush1.msra.mxu0 0.0
    %237 = vmatprep.subr.mxu0 0.0
    %238 = vmatpush1.msra.mxu0 0.0
    %239 = vmatprep.subr.mxu0 0.0
    %240 = vmatpush1.msra.mxu0 0.0
    %241 = vmatprep.subr.mxu0 0.0
    %242 = vmatpush1.msra.mxu0 0.0
    %243 = vmatprep.subr.mxu0 0.0
    %244 = vmatpush1.msra.mxu0 %v57
    %245 = vmatprep.subr.mxu0 0.0
    %246 = vmatpush1.msra.mxu0 %v56
    %247 = vmatprep.subr.mxu0 0.0
    %248 = vmatpush1.msra.mxu0 %v55
    %249 = vmatprep.subr.mxu0 0.0
    %250 = vmatpush1.msra.mxu0 %v54
    %251 = vmatprep.subr.mxu0 0.0
    %252 = vmatpush2.msra.mxu0 0.0
    %253 = vmatprep.subr.mxu0 0.0
    %254 = vmatpush2.msra.mxu0 0.0
    %255 = vmatprep.subr.mxu0 0.0
    %256 = vmatpush2.msra.mxu0 0.0
    %257 = vmatprep.subr.mxu0 0.0
    %258 = vmatpush2.msra.mxu0 0.0
    %259 = vmatprep.subr.mxu0 0.0
    %260 = vmatpush2.msra.mxu0 0.0
    %261 = vmatprep.subr.mxu0 0.0
    %262 = vmatpush2.msra.mxu0 0.0
    %263 = vmatprep.subr.mxu0 0.0
    %264 = vmatpush2.msra.mxu0 0.0
    %265 = vmatprep.subr.mxu0 0.0
    %266 = vmatpush2.msra.mxu0 0.0
    %267 = vmatprep.subr.mxu0 0.0
    %268 = vmatpush2.msra.mxu0 0.0
    %269 = vmatprep.subr.mxu0 0.0
    %270 = vmatpush2.msra.mxu0 0.0
    %271 = vmatprep.subr.mxu0 0.0
    %272 = vmatpush2.msra.mxu0 0.0
    %273 = vmatprep.subr.mxu0 0.0
    %274 = vmatpush2.msra.mxu0 0.0
    %275 = vmatprep.subr.mxu0 0.0
    %276 = vmatpush2.msra.mxu0 0.0
    %277 = vmatprep.subr.mxu0 0.0
    %278 = vmatpush2.msra.mxu0 0.0
    %279 = vmatprep.subr.mxu0 0.0
    %280 = vmatpush2.msra.mxu0 0.0
    %281 = vmatprep.subr.mxu0 0.0
    %282 = vmatpush2.msra.mxu0 0.0
    %283 = vmatprep.mubr.f32.mxu0 0.0
    %284 = vmatmul.mubr.f32.gmra.mxu0 %v217
    %v285 = vpop.f32.mrf.mxu0
    %v286 = vadd.f32 %v72, %v285
    %v287 = vpop.f32.mrf.mxu0
    %288 = vdwg.mxu0
    %v290 = vrot.slane %v286, 6
    %v292 = vadd.f32 %v109, %v290
    %v293 = vxor.u32 %v292, 2147483648
    %v294 = vmul.f32 %v293, 1.442695
    %v295 = vpow.pop %v294
    %v296 = vadd.f32 %v295, 1.0
    %v297 = vrcp.pop %v296
    %v298 = vmul.f32 1.0, %v297
    %299 = vrot.lane.b32.xlu0 %v290, 64
    %v300 = vpop.permute.xlu0 %299
    %v302 = vmul.f32 %v298, %v300
    %304 = vrot.lane.b32.xlu0 %v302, 64
    %v305 = vpop.permute.xlu0 %304
    %v307 = vadd.f32 %v109, %v305
    %v308 = vtanh.pop %v307
    %v309 = vsub.f32 1.0, %v298
    %311 = vrot.lane.b32.xlu0 %v308, 96
    %v312 = vpop.permute.xlu0 %311
    %v314 = vmul.f32 %v309, %v312
    %v315 = vrot.slane %v210, 6
    %v317 = vmul.f32 %v298, %v315
    %v318 = vadd.f32 %v314, %v317
    %320 = vrot.lane.b32.xlu0 %v318, 96
    %v321 = vpop.permute.xlu0 %320
    %vm323 = vcmask 257026
    %324 = vst.msk [vmem:[#allocation2] sm:$0xc] %vm323, %v321
    %v325 = vrot.slane %v318, 2
    %326 = vrot.lane.b32.xlu0 %v325, 96
    %v327 = vpop.permute.xlu0 %326
    %v328 = vsel %vm111, %v327, 0
    %330 = vmatprep.subr.mxu0 0.0
    %331 = vmatpush1.msra.mxu0 0.0
    %332 = vmatprep.subr.mxu0 0.0
    %333 = vmatpush1.msra.mxu0 0.0
    %334 = vmatprep.subr.mxu0 0.0
    %335 = vmatpush1.msra.mxu0 0.0
    %336 = vmatprep.subr.mxu0 0.0
    %337 = vmatpush1.msra.mxu0 0.0
    %338 = vmatprep.subr.mxu0 0.0
    %339 = vmatpush1.msra.mxu0 0.0
    %340 = vmatprep.subr.mxu0 0.0
    %341 = vmatpush1.msra.mxu0 0.0
    %342 = vmatprep.subr.mxu0 0.0
    %343 = vmatpush1.msra.mxu0 0.0
    %344 = vmatprep.subr.mxu0 0.0
    %345 = vmatpush1.msra.mxu0 0.0
    %346 = vmatprep.subr.mxu0 0.0
    %347 = vmatpush1.msra.mxu0 0.0
    %348 = vmatprep.subr.mxu0 0.0
    %349 = vmatpush1.msra.mxu0 0.0
    %350 = vmatprep.subr.mxu0 0.0
    %351 = vmatpush1.msra.mxu0 0.0
    %352 = vmatprep.subr.mxu0 0.0
    %353 = vmatpush1.msra.mxu0 0.0
    %354 = vmatprep.subr.mxu0 0.0
    %355 = vmatpush1.msra.mxu0 %v57
    %356 = vmatprep.subr.mxu0 0.0
    %357 = vmatpush1.msra.mxu0 %v56
    %358 = vmatprep.subr.mxu0 0.0
    %359 = vmatpush1.msra.mxu0 %v55
    %360 = vmatprep.subr.mxu0 0.0
    %361 = vmatpush1.msra.mxu0 %v54
    %362 = vmatprep.subr.mxu0 0.0
    %363 = vmatpush2.msra.mxu0 0.0
    %364 = vmatprep.subr.mxu0 0.0
    %365 = vmatpush2.msra.mxu0 0.0
    %366 = vmatprep.subr.mxu0 0.0
    %367 = vmatpush2.msra.mxu0 0.0
    %368 = vmatprep.subr.mxu0 0.0
    %369 = vmatpush2.msra.mxu0 0.0
    %370 = vmatprep.subr.mxu0 0.0
    %371 = vmatpush2.msra.mxu0 0.0
    %372 = vmatprep.subr.mxu0 0.0
    %373 = vmatpush2.msra.mxu0 0.0
    %374 = vmatprep.subr.mxu0 0.0
    %375 = vmatpush2.msra.mxu0 0.0
    %376 = vmatprep.subr.mxu0 0.0
    %377 = vmatpush2.msra.mxu0 0.0
    %378 = vmatprep.subr.mxu0 0.0
    %379 = vmatpush2.msra.mxu0 0.0
    %380 = vmatprep.subr.mxu0 0.0
    %381 = vmatpush2.msra.mxu0 0.0
    %382 = vmatprep.subr.mxu0 0.0
    %383 = vmatpush2.msra.mxu0 0.0
    %384 = vmatprep.subr.mxu0 0.0
    %385 = vmatpush2.msra.mxu0 0.0
    %386 = vmatprep.subr.mxu0 0.0
    %387 = vmatpush2.msra.mxu0 0.0
    %388 = vmatprep.subr.mxu0 0.0
    %389 = vmatpush2.msra.mxu0 0.0
    %390 = vmatprep.subr.mxu0 0.0
    %391 = vmatpush2.msra.mxu0 0.0
    %392 = vmatprep.subr.mxu0 0.0
    %393 = vmatpush2.msra.mxu0 0.0
    %394 = vmatprep.mubr.f32.mxu0 0.0
    %395 = vmatmul.mubr.f32.gmra.mxu0 %v328
    %v396 = vpop.f32.mrf.mxu0
    %v397 = vadd.f32 %v72, %v396
    %v398 = vpop.f32.mrf.mxu0
    %399 = vdwg.mxu0
    %v401 = vrot.slane %v397, 4
    %v403 = vadd.f32 %v109, %v401
    %v404 = vxor.u32 %v403, 2147483648
    %v405 = vmul.f32 %v404, 1.442695
    %v406 = vpow.pop %v405
    %v407 = vadd.f32 %v406, 1.0
    %v408 = vrcp.pop %v407
    %v409 = vmul.f32 1.0, %v408
    %410 = vrot.lane.b32.xlu0 %v401, 64
    %v411 = vpop.permute.xlu0 %410
    %v413 = vmul.f32 %v409, %v411
    %415 = vrot.lane.b32.xlu0 %v413, 64
    %v416 = vpop.permute.xlu0 %415
    %v418 = vadd.f32 %v109, %v416
    %v419 = vtanh.pop %v418
    %v420 = vsub.f32 1.0, %v409
    %422 = vrot.lane.b32.xlu0 %v419, 96
    %v423 = vpop.permute.xlu0 %422
    %v425 = vmul.f32 %v420, %v423
    %v426 = vrot.slane %v318, 6
    %v428 = vmul.f32 %v409, %v426
    %v429 = vadd.f32 %v425, %v428
    %431 = vrot.lane.b32.xlu0 %v429, 96
    %v432 = vpop.permute.xlu0 %431
    %vm434 = vcmask 259076
    %435 = vst.msk [vmem:[#allocation2] sm:$0x30] %vm434, %v432
    %v436 = vrot.slane %v429, 4
    %437 = vrot.lane.b32.xlu0 %v436, 96
    %v438 = vpop.permute.xlu0 %437
    %v439 = vsel %vm111, %v438, 0
    %441 = vmatprep.subr.mxu0 0.0
    %442 = vmatpush1.msra.mxu0 0.0
    %443 = vmatprep.subr.mxu0 0.0
    %444 = vmatpush1.msra.mxu0 0.0
    %445 = vmatprep.subr.mxu0 0.0
    %446 = vmatpush1.msra.mxu0 0.0
    %447 = vmatprep.subr.mxu0 0.0
    %448 = vmatpush1.msra.mxu0 0.0
    %449 = vmatprep.subr.mxu0 0.0
    %450 = vmatpush1.msra.mxu0 0.0
    %451 = vmatprep.subr.mxu0 0.0
    %452 = vmatpush1.msra.mxu0 0.0
    %453 = vmatprep.subr.mxu0 0.0
    %454 = vmatpush1.msra.mxu0 0.0
    %455 = vmatprep.subr.mxu0 0.0
    %456 = vmatpush1.msra.mxu0 0.0
    %457 = vmatprep.subr.mxu0 0.0
    %458 = vmatpush1.msra.mxu0 0.0
    %459 = vmatprep.subr.mxu0 0.0
    %460 = vmatpush1.msra.mxu0 0.0
    %461 = vmatprep.subr.mxu0 0.0
    %462 = vmatpush1.msra.mxu0 0.0
    %463 = vmatprep.subr.mxu0 0.0
    %464 = vmatpush1.msra.mxu0 0.0
    %465 = vmatprep.subr.mxu0 0.0
    %466 = vmatpush1.msra.mxu0 %v57
    %467 = vmatprep.subr.mxu0 0.0
    %468 = vmatpush1.msra.mxu0 %v56
    %469 = vmatprep.subr.mxu0 0.0
    %470 = vmatpush1.msra.mxu0 %v55
    %471 = vmatprep.subr.mxu0 0.0
    %472 = vmatpush1.msra.mxu0 %v54
    %473 = vmatprep.subr.mxu0 0.0
    %474 = vmatpush2.msra.mxu0 0.0
    %475 = vmatprep.subr.mxu0 0.0
    %476 = vmatpush2.msra.mxu0 0.0
    %477 = vmatprep.subr.mxu0 0.0
    %478 = vmatpush2.msra.mxu0 0.0
    %479 = vmatprep.subr.mxu0 0.0
    %480 = vmatpush2.msra.mxu0 0.0
    %481 = vmatprep.subr.mxu0 0.0
    %482 = vmatpush2.msra.mxu0 0.0
    %483 = vmatprep.subr.mxu0 0.0
    %484 = vmatpush2.msra.mxu0 0.0
    %485 = vmatprep.subr.mxu0 0.0
    %486 = vmatpush2.msra.mxu0 0.0
    %487 = vmatprep.subr.mxu0 0.0
    %488 = vmatpush2.msra.mxu0 0.0
    %489 = vmatprep.subr.mxu0 0.0
    %490 = vmatpush2.msra.mxu0 0.0
    %491 = vmatprep.subr.mxu0 0.0
    %492 = vmatpush2.msra.mxu0 0.0
    %493 = vmatprep.subr.mxu0 0.0
    %494 = vmatpush2.msra.mxu0 0.0
    %495 = vmatprep.subr.mxu0 0.0
    %496 = vmatpush2.msra.mxu0 0.0
    %497 = vmatprep.subr.mxu0 0.0
    %498 = vmatpush2.msra.mxu0 0.0
    %499 = vmatprep.subr.mxu0 0.0
    %500 = vmatpush2.msra.mxu0 0.0
    %501 = vmatprep.subr.mxu0 0.0
    %502 = vmatpush2.msra.mxu0 0.0
    %503 = vmatprep.subr.mxu0 0.0
    %504 = vmatpush2.msra.mxu0 0.0
    %505 = vmatprep.mubr.f32.mxu0 0.0
    %506 = vmatmul.mubr.f32.gmra.mxu0 %v439
    %v507 = vpop.f32.mrf.mxu0
    %v508 = vadd.f32 %v72, %v507
    %v509 = vpop.f32.mrf.mxu0
    %510 = vdwg.mxu0
    %v512 = vrot.slane %v508, 2
    %v514 = vadd.f32 %v109, %v512
    %v515 = vxor.u32 %v514, 2147483648
    %v516 = vmul.f32 %v515, 1.442695
    %v517 = vpow.pop %v516
    %v518 = vadd.f32 %v517, 1.0
    %v519 = vrcp.pop %v518
    %v520 = vmul.f32 1.0, %v519
    %521 = vrot.lane.b32.xlu0 %v512, 64
    %v522 = vpop.permute.xlu0 %521
    %v524 = vmul.f32 %v520, %v522
    %526 = vrot.lane.b32.xlu0 %v524, 64
    %v527 = vpop.permute.xlu0 %526
    %v529 = vadd.f32 %v109, %v527
    %v530 = vtanh.pop %v529
    %v531 = vsub.f32 1.0, %v520
    %533 = vrot.lane.b32.xlu0 %v530, 96
    %v534 = vpop.permute.xlu0 %533
    %v536 = vmul.f32 %v531, %v534
    %v537 = vrot.slane %v429, 6
    %v539 = vmul.f32 %v520, %v537
    %v540 = vadd.f32 %v536, %v539
    %542 = vrot.lane.b32.xlu0 %v540, 96
    %v543 = vpop.permute.xlu0 %542
    %vm545 = vcmask 261126
    %546 = vst.msk [vmem:[#allocation2] sm:$0xc0] %vm545, %v543
    %v547 = vrot.slane %v540, 6
    %548 = vrot.lane.b32.xlu0 %v547, 96
    %v549 = vpop.permute.xlu0 %548
    %v550 = vsel %vm111, %v549, 0
    %552 = vmatprep.subr.mxu0 0.0
    %553 = vmatpush1.msra.mxu0 0.0
    %554 = vmatprep.subr.mxu0 0.0
    %555 = vmatpush1.msra.mxu0 0.0
    %556 = vmatprep.subr.mxu0 0.0
    %557 = vmatpush1.msra.mxu0 0.0
    %558 = vmatprep.subr.mxu0 0.0
    %559 = vmatpush1.msra.mxu0 0.0
    %560 = vmatprep.subr.mxu0 0.0
    %561 = vmatpush1.msra.mxu0 0.0
    %562 = vmatprep.subr.mxu0 0.0
    %563 = vmatpush1.msra.mxu0 0.0
    %564 = vmatprep.subr.mxu0 0.0
    %565 = vmatpush1.msra.mxu0 0.0
    %566 = vmatprep.subr.mxu0 0.0
    %567 = vmatpush1.msra.mxu0 0.0
    %568 = vmatprep.subr.mxu0 0.0
    %569 = vmatpush1.msra.mxu0 0.0
    %570 = vmatprep.subr.mxu0 0.0
    %571 = vmatpush1.msra.mxu0 0.0
    %572 = vmatprep.subr.mxu0 0.0
    %573 = vmatpush1.msra.mxu0 0.0
    %574 = vmatprep.subr.mxu0 0.0
    %575 = vmatpush1.msra.mxu0 0.0
    %576 = vmatprep.subr.mxu0 0.0
    %577 = vmatpush1.msra.mxu0 %v57
    %578 = vmatprep.subr.mxu0 0.0
    %579 = vmatpush1.msra.mxu0 %v56
    %580 = vmatprep.subr.mxu0 0.0
    %581 = vmatpush1.msra.mxu0 %v55
    %582 = vmatprep.subr.mxu0 0.0
    %583 = vmatpush1.msra.mxu0 %v54
    %584 = vmatprep.subr.mxu0 0.0
    %585 = vmatpush2.msra.mxu0 0.0
    %586 = vmatprep.subr.mxu0 0.0
    %587 = vmatpush2.msra.mxu0 0.0
    %588 = vmatprep.subr.mxu0 0.0
    %589 = vmatpush2.msra.mxu0 0.0
    %590 = vmatprep.subr.mxu0 0.0
    %591 = vmatpush2.msra.mxu0 0.0
    %592 = vmatprep.subr.mxu0 0.0
    %593 = vmatpush2.msra.mxu0 0.0
    %594 = vmatprep.subr.mxu0 0.0
    %595 = vmatpush2.msra.mxu0 0.0
    %596 = vmatprep.subr.mxu0 0.0
    %597 = vmatpush2.msra.mxu0 0.0
    %598 = vmatprep.subr.mxu0 0.0
    %599 = vmatpush2.msra.mxu0 0.0
    %600 = vmatprep.subr.mxu0 0.0
    %601 = vmatpush2.msra.mxu0 0.0
    %602 = vmatprep.subr.mxu0 0.0
    %603 = vmatpush2.msra.mxu0 0.0
    %604 = vmatprep.subr.mxu0 0.0
    %605 = vmatpush2.msra.mxu0 0.0
    %606 = vmatprep.subr.mxu0 0.0
    %607 = vmatpush2.msra.mxu0 0.0
    %608 = vmatprep.subr.mxu0 0.0
    %609 = vmatpush2.msra.mxu0 0.0
    %610 = vmatprep.subr.mxu0 0.0
    %611 = vmatpush2.msra.mxu0 0.0
    %612 = vmatprep.subr.mxu0 0.0
    %613 = vmatpush2.msra.mxu0 0.0
    %614 = vmatprep.subr.mxu0 0.0
    %615 = vmatpush2.msra.mxu0 0.0
    %616 = vmatprep.mubr.f32.mxu0 0.0
    %617 = vmatmul.mubr.f32.gmra.mxu0 %v550
    %v618 = vpop.f32.mrf.mxu0
    %v619 = vadd.f32 %v72, %v618
    %v620 = vpop.f32.mrf.mxu0
    %621 = vdwg.mxu0
    %v622 = vadd.f32 %v110, %v619
    %v623 = vxor.u32 %v622, 2147483648
    %v624 = vmul.f32 %v623, 1.442695
    %v625 = vpow.pop %v624
    %v626 = vadd.f32 %v625, 1.0
    %v627 = vrcp.pop %v626
    %v628 = vmul.f32 1.0, %v627
    %630 = vrot.lane.b32.xlu0 %v619, 64
    %v631 = vpop.permute.xlu0 %630
    %v633 = vmul.f32 %v628, %v631
    %635 = vrot.lane.b32.xlu0 %v633, 64
    %v636 = vpop.permute.xlu0 %635
    %v638 = vadd.f32 %v110, %v636
    %v639 = vtanh.pop %v638
    %v640 = vsub.f32 1.0, %v628
    %642 = vrot.lane.b32.xlu0 %v639, 96
    %v643 = vpop.permute.xlu0 %642
    %v645 = vmul.f32 %v640, %v643
    %v647 = vmul.f32 %v628, %v547
    %v648 = vadd.f32 %v645, %v647
    %650 = vrot.lane.b32.xlu0 %v648, 96
    %v651 = vpop.permute.xlu0 %650
    %653 = vst.msk [vmem:[#allocation2 + $0x8] sm:$0x3] %vm215, %v651
    %v654 = vsel %vm111, %v651, 0
    %656 = vmatprep.subr.mxu0 0.0
    %657 = vmatpush1.msra.mxu0 0.0
    %658 = vmatprep.subr.mxu0 0.0
    %659 = vmatpush1.msra.mxu0 0.0
    %660 = vmatprep.subr.mxu0 0.0
    %661 = vmatpush1.msra.mxu0 0.0
    %662 = vmatprep.subr.mxu0 0.0
    %663 = vmatpush1.msra.mxu0 0.0
    %664 = vmatprep.subr.mxu0 0.0
    %665 = vmatpush1.msra.mxu0 0.0
    %666 = vmatprep.subr.mxu0 0.0
    %667 = vmatpush1.msra.mxu0 0.0
    %668 = vmatprep.subr.mxu0 0.0
    %669 = vmatpush1.msra.mxu0 0.0
    %670 = vmatprep.subr.mxu0 0.0
    %671 = vmatpush1.msra.mxu0 0.0
    %672 = vmatprep.subr.mxu0 0.0
    %673 = vmatpush1.msra.mxu0 0.0
    %674 = vmatprep.subr.mxu0 0.0
    %675 = vmatpush1.msra.mxu0 0.0
    %676 = vmatprep.subr.mxu0 0.0
    %677 = vmatpush1.msra.mxu0 0.0
    %678 = vmatprep.subr.mxu0 0.0
    %679 = vmatpush1.msra.mxu0 0.0
    %680 = vmatprep.subr.mxu0 0.0
    %681 = vmatpush1.msra.mxu0 %v57
    %682 = vmatprep.subr.mxu0 0.0
    %683 = vmatpush1.msra.mxu0 %v56
    %684 = vmatprep.subr.mxu0 0.0
    %685 = vmatpush1.msra.mxu0 %v55
    %686 = vmatprep.subr.mxu0 0.0
    %687 = vmatpush1.msra.mxu0 %v54
    %688 = vmatprep.subr.mxu0 0.0
    %689 = vmatpush2.msra.mxu0 0.0
    %690 = vmatprep.subr.mxu0 0.0
    %691 = vmatpush2.msra.mxu0 0.0
    %692 = vmatprep.subr.mxu0 0.0
    %693 = vmatpush2.msra.mxu0 0.0
    %694 = vmatprep.subr.mxu0 0.0
    %695 = vmatpush2.msra.mxu0 0.0
    %696 = vmatprep.subr.mxu0 0.0
    %697 = vmatpush2.msra.mxu0 0.0
    %698 = vmatprep.subr.mxu0 0.0
    %699 = vmatpush2.msra.mxu0 0.0
    %700 = vmatprep.subr.mxu0 0.0
    %701 = vmatpush2.msra.mxu0 0.0
    %702 = vmatprep.subr.mxu0 0.0
    %703 = vmatpush2.msra.mxu0 0.0
    %704 = vmatprep.subr.mxu0 0.0
    %705 = vmatpush2.msra.mxu0 0.0
    %706 = vmatprep.subr.mxu0 0.0
    %707 = vmatpush2.msra.mxu0 0.0
    %708 = vmatprep.subr.mxu0 0.0
    %709 = vmatpush2.msra.mxu0 0.0
    %710 = vmatprep.subr.mxu0 0.0
    %711 = vmatpush2.msra.mxu0 0.0
    %712 = vmatprep.subr.mxu0 0.0
    %713 = vmatpush2.msra.mxu0 0.0
    %714 = vmatprep.subr.mxu0 0.0
    %715 = vmatpush2.msra.mxu0 0.0
    %716 = vmatprep.subr.mxu0 0.0
    %717 = vmatpush2.msra.mxu0 0.0
    %718 = vmatprep.subr.mxu0 0.0
    %719 = vmatpush2.msra.mxu0 0.0
    %720 = vmatprep.mubr.f32.mxu0 0.0
    %721 = vmatmul.mubr.f32.gmra.mxu0 %v654
    %v722 = vpop.f32.mrf.mxu0
    %v723 = vadd.f32 %v72, %v722
    %v724 = vpop.f32.mrf.mxu0
    %725 = vdwg.mxu0
    %v727 = vrot.slane %v723, 6
    %v729 = vadd.f32 %v110, %v727
    %v730 = vxor.u32 %v729, 2147483648
    %v731 = vmul.f32 %v730, 1.442695
    %v732 = vpow.pop %v731
    %v733 = vadd.f32 %v732, 1.0
    %v734 = vrcp.pop %v733
    %v735 = vmul.f32 1.0, %v734
    %736 = vrot.lane.b32.xlu0 %v727, 64
    %v737 = vpop.permute.xlu0 %736
    %v739 = vmul.f32 %v735, %v737
    %741 = vrot.lane.b32.xlu0 %v739, 64
    %v742 = vpop.permute.xlu0 %741
    %v744 = vadd.f32 %v110, %v742
    %v745 = vtanh.pop %v744
    %v746 = vsub.f32 1.0, %v735
    %748 = vrot.lane.b32.xlu0 %v745, 96
    %v749 = vpop.permute.xlu0 %748
    %v751 = vmul.f32 %v746, %v749
    %v752 = vrot.slane %v648, 6
    %v754 = vmul.f32 %v735, %v752
    %v755 = vadd.f32 %v751, %v754
    %757 = vrot.lane.b32.xlu0 %v755, 96
    %v758 = vpop.permute.xlu0 %757
    %760 = vst.msk [vmem:[#allocation2 + $0x8] sm:$0xc] %vm323, %v758
    %v761 = vrot.slane %v755, 2
    %762 = vrot.lane.b32.xlu0 %v761, 96
    %v763 = vpop.permute.xlu0 %762
    %v764 = vsel %vm111, %v763, 0
    %766 = vmatprep.subr.mxu0 0.0
    %767 = vmatpush1.msra.mxu0 0.0
    %768 = vmatprep.subr.mxu0 0.0
    %769 = vmatpush1.msra.mxu0 0.0
    %770 = vmatprep.subr.mxu0 0.0
    %771 = vmatpush1.msra.mxu0 0.0
    %772 = vmatprep.subr.mxu0 0.0
    %773 = vmatpush1.msra.mxu0 0.0
    %774 = vmatprep.subr.mxu0 0.0
    %775 = vmatpush1.msra.mxu0 0.0
    %776 = vmatprep.subr.mxu0 0.0
    %777 = vmatpush1.msra.mxu0 0.0
    %778 = vmatprep.subr.mxu0 0.0
    %779 = vmatpush1.msra.mxu0 0.0
    %780 = vmatprep.subr.mxu0 0.0
    %781 = vmatpush1.msra.mxu0 0.0
    %782 = vmatprep.subr.mxu0 0.0
    %783 = vmatpush1.msra.mxu0 0.0
    %784 = vmatprep.subr.mxu0 0.0
    %785 = vmatpush1.msra.mxu0 0.0
    %786 = vmatprep.subr.mxu0 0.0
    %787 = vmatpush1.msra.mxu0 0.0
    %788 = vmatprep.subr.mxu0 0.0
    %789 = vmatpush1.msra.mxu0 0.0
    %790 = vmatprep.subr.mxu0 0.0
    %791 = vmatpush1.msra.mxu0 %v57
    %792 = vmatprep.subr.mxu0 0.0
    %793 = vmatpush1.msra.mxu0 %v56
    %794 = vmatprep.subr.mxu0 0.0
    %795 = vmatpush1.msra.mxu0 %v55
    %796 = vmatprep.subr.mxu0 0.0
    %797 = vmatpush1.msra.mxu0 %v54
    %798 = vmatprep.subr.mxu0 0.0
    %799 = vmatpush2.msra.mxu0 0.0
    %800 = vmatprep.subr.mxu0 0.0
    %801 = vmatpush2.msra.mxu0 0.0
    %802 = vmatprep.subr.mxu0 0.0
    %803 = vmatpush2.msra.mxu0 0.0
    %804 = vmatprep.subr.mxu0 0.0
    %805 = vmatpush2.msra.mxu0 0.0
    %806 = vmatprep.subr.mxu0 0.0
    %807 = vmatpush2.msra.mxu0 0.0
    %808 = vmatprep.subr.mxu0 0.0
    %809 = vmatpush2.msra.mxu0 0.0
    %810 = vmatprep.subr.mxu0 0.0
    %811 = vmatpush2.msra.mxu0 0.0
    %812 = vmatprep.subr.mxu0 0.0
    %813 = vmatpush2.msra.mxu0 0.0
    %814 = vmatprep.subr.mxu0 0.0
    %815 = vmatpush2.msra.mxu0 0.0
    %816 = vmatprep.subr.mxu0 0.0
    %817 = vmatpush2.msra.mxu0 0.0
    %818 = vmatprep.subr.mxu0 0.0
    %819 = vmatpush2.msra.mxu0 0.0
    %820 = vmatprep.subr.mxu0 0.0
    %821 = vmatpush2.msra.mxu0 0.0
    %822 = vmatprep.subr.mxu0 0.0
    %823 = vmatpush2.msra.mxu0 0.0
    %824 = vmatprep.subr.mxu0 0.0
    %825 = vmatpush2.msra.mxu0 0.0
    %826 = vmatprep.subr.mxu0 0.0
    %827 = vmatpush2.msra.mxu0 0.0
    %828 = vmatprep.subr.mxu0 0.0
    %829 = vmatpush2.msra.mxu0 0.0
    %830 = vmatprep.mubr.f32.mxu0 0.0
    %831 = vmatmul.mubr.f32.gmra.mxu0 %v764
    %v832 = vpop.f32.mrf.mxu0
    %v833 = vadd.f32 %v72, %v832
    %v834 = vpop.f32.mrf.mxu0
    %835 = vdwg.mxu0
    %v837 = vrot.slane %v833, 4
    %v839 = vadd.f32 %v110, %v837
    %v840 = vxor.u32 %v839, 2147483648
    %v841 = vmul.f32 %v840, 1.442695
    %v842 = vpow.pop %v841
    %v843 = vadd.f32 %v842, 1.0
    %v844 = vrcp.pop %v843
    %v845 = vmul.f32 1.0, %v844
    %846 = vrot.lane.b32.xlu0 %v837, 64
    %v847 = vpop.permute.xlu0 %846
    %v849 = vmul.f32 %v845, %v847
    %851 = vrot.lane.b32.xlu0 %v849, 64
    %v852 = vpop.permute.xlu0 %851
    %v854 = vadd.f32 %v110, %v852
    %v855 = vtanh.pop %v854
    %v856 = vsub.f32 1.0, %v845
    %858 = vrot.lane.b32.xlu0 %v855, 96
    %v859 = vpop.permute.xlu0 %858
    %v861 = vmul.f32 %v856, %v859
    %v862 = vrot.slane %v755, 6
    %v864 = vmul.f32 %v845, %v862
    %v865 = vadd.f32 %v861, %v864
    %867 = vrot.lane.b32.xlu0 %v865, 96
    %v868 = vpop.permute.xlu0 %867
    %870 = vst.msk [vmem:[#allocation2 + $0x8] sm:$0x30] %vm434, %v868
    %v871 = vrot.slane %v865, 4
    %872 = vrot.lane.b32.xlu0 %v871, 96
    %v873 = vpop.permute.xlu0 %872
    %v874 = vsel %vm111, %v873, 0
    %876 = vmatprep.subr.mxu0 0.0
    %877 = vmatpush1.msra.mxu0 0.0
    %878 = vmatprep.subr.mxu0 0.0
    %879 = vmatpush1.msra.mxu0 0.0
    %880 = vmatprep.subr.mxu0 0.0
    %881 = vmatpush1.msra.mxu0 0.0
    %882 = vmatprep.subr.mxu0 0.0
    %883 = vmatpush1.msra.mxu0 0.0
    %884 = vmatprep.subr.mxu0 0.0
    %885 = vmatpush1.msra.mxu0 0.0
    %886 = vmatprep.subr.mxu0 0.0
    %887 = vmatpush1.msra.mxu0 0.0
    %888 = vmatprep.subr.mxu0 0.0
    %889 = vmatpush1.msra.mxu0 0.0
    %890 = vmatprep.subr.mxu0 0.0
    %891 = vmatpush1.msra.mxu0 0.0
    %892 = vmatprep.subr.mxu0 0.0
    %893 = vmatpush1.msra.mxu0 0.0
    %894 = vmatprep.subr.mxu0 0.0
    %895 = vmatpush1.msra.mxu0 0.0
    %896 = vmatprep.subr.mxu0 0.0
    %897 = vmatpush1.msra.mxu0 0.0
    %898 = vmatprep.subr.mxu0 0.0
    %899 = vmatpush1.msra.mxu0 0.0
    %900 = vmatprep.subr.mxu0 0.0
    %901 = vmatpush1.msra.mxu0 %v57
    %902 = vmatprep.subr.mxu0 0.0
    %903 = vmatpush1.msra.mxu0 %v56
    %904 = vmatprep.subr.mxu0 0.0
    %905 = vmatpush1.msra.mxu0 %v55
    %906 = vmatprep.subr.mxu0 0.0
    %907 = vmatpush1.msra.mxu0 %v54
    %908 = vmatprep.subr.mxu0 0.0
    %909 = vmatpush2.msra.mxu0 0.0
    %910 = vmatprep.subr.mxu0 0.0
    %911 = vmatpush2.msra.mxu0 0.0
    %912 = vmatprep.subr.mxu0 0.0
    %913 = vmatpush2.msra.mxu0 0.0
    %914 = vmatprep.subr.mxu0 0.0
    %915 = vmatpush2.msra.mxu0 0.0
    %916 = vmatprep.subr.mxu0 0.0
    %917 = vmatpush2.msra.mxu0 0.0
    %918 = vmatprep.subr.mxu0 0.0
    %919 = vmatpush2.msra.mxu0 0.0
    %920 = vmatprep.subr.mxu0 0.0
    %921 = vmatpush2.msra.mxu0 0.0
    %922 = vmatprep.subr.mxu0 0.0
    %923 = vmatpush2.msra.mxu0 0.0
    %924 = vmatprep.subr.mxu0 0.0
    %925 = vmatpush2.msra.mxu0 0.0
    %926 = vmatprep.subr.mxu0 0.0
    %927 = vmatpush2.msra.mxu0 0.0
    %928 = vmatprep.subr.mxu0 0.0
    %929 = vmatpush2.msra.mxu0 0.0
    %930 = vmatprep.subr.mxu0 0.0
    %931 = vmatpush2.msra.mxu0 0.0
    %932 = vmatprep.subr.mxu0 0.0
    %933 = vmatpush2.msra.mxu0 0.0
    %934 = vmatprep.subr.mxu0 0.0
    %935 = vmatpush2.msra.mxu0 0.0
    %936 = vmatprep.subr.mxu0 0.0
    %937 = vmatpush2.msra.mxu0 0.0
    %938 = vmatprep.subr.mxu0 0.0
    %939 = vmatpush2.msra.mxu0 0.0
    %940 = vmatprep.mubr.f32.mxu0 0.0
    %941 = vmatmul.mubr.f32.gmra.mxu0 %v874
    %v942 = vpop.f32.mrf.mxu0
    %v943 = vadd.f32 %v72, %v942
    %v944 = vpop.f32.mrf.mxu0
    %945 = vdwg.mxu0
    %v947 = vrot.slane %v943, 2
    %v949 = vadd.f32 %v110, %v947
    %v950 = vxor.u32 %v949, 2147483648
    %v951 = vmul.f32 %v950, 1.442695
    %v952 = vpow.pop %v951
    %v953 = vadd.f32 %v952, 1.0
    %v954 = vrcp.pop %v953
    %v955 = vmul.f32 1.0, %v954
    %956 = vrot.lane.b32.xlu0 %v947, 64
    %v957 = vpop.permute.xlu0 %956
    %v959 = vmul.f32 %v955, %v957
    %961 = vrot.lane.b32.xlu0 %v959, 64
    %v962 = vpop.permute.xlu0 %961
    %v964 = vadd.f32 %v110, %v962
    %v965 = vtanh.pop %v964
    %v966 = vsub.f32 1.0, %v955
    %968 = vrot.lane.b32.xlu0 %v965, 96
    %v969 = vpop.permute.xlu0 %968
    %v971 = vmul.f32 %v966, %v969
    %v972 = vrot.slane %v865, 6
    %v974 = vmul.f32 %v955, %v972
    %v975 = vadd.f32 %v971, %v974
    %977 = vrot.lane.b32.xlu0 %v975, 96
    %v978 = vpop.permute.xlu0 %977
    %980 = vst.msk [vmem:[#allocation2 + $0x8] sm:$0xc0] %vm545, %v978
    %v981 = vld [vmem:[#allocation2] sm:$0xff]
    %v982 = vld [vmem:[#allocation2 + $0x8] sm:$0xff]
    %v984 = vlaneseq
    %v985 = vshrl.u32 %v984, 7
    %v986 = vsub.s32 0, %v985
    %v987 = vrot.slane %v66, %v986
    %v990 = vsel %vm111, %v981, 0
    %v993 = vsel %vm111, %v982, 0
    %995 = vmatprep.subr.mxu0 0.0
    %996 = vmatpush1.msra.mxu0 0.0
    %997 = vmatprep.subr.mxu0 0.0
    %998 = vmatpush1.msra.mxu0 0.0
    %999 = vmatprep.subr.mxu0 0.0
    %1000 = vmatpush1.msra.mxu0 0.0
    %1001 = vmatprep.subr.mxu0 0.0
    %1002 = vmatpush1.msra.mxu0 0.0
    %1003 = vmatprep.subr.mxu0 0.0
    %1004 = vmatpush1.msra.mxu0 0.0
    %1005 = vmatprep.subr.mxu0 0.0
    %1006 = vmatpush1.msra.mxu0 0.0
    %1007 = vmatprep.subr.mxu0 0.0
    %1008 = vmatpush1.msra.mxu0 0.0
    %1009 = vmatprep.subr.mxu0 0.0
    %1010 = vmatpush1.msra.mxu0 0.0
    %1011 = vmatprep.subr.mxu0 0.0
    %1012 = vmatpush1.msra.mxu0 0.0
    %1013 = vmatprep.subr.mxu0 0.0
    %1014 = vmatpush1.msra.mxu0 0.0
    %1015 = vmatprep.subr.mxu0 0.0
    %1016 = vmatpush1.msra.mxu0 0.0
    %1017 = vmatprep.subr.mxu0 0.0
    %1018 = vmatpush1.msra.mxu0 0.0
    %1019 = vmatprep.subr.mxu0 0.0
    %1020 = vmatpush1.msra.mxu0 %v65
    %1021 = vmatprep.subr.mxu0 0.0
    %1022 = vmatpush1.msra.mxu0 %v64
    %1023 = vmatprep.subr.mxu0 0.0
    %1024 = vmatpush1.msra.mxu0 %v63
    %1025 = vmatprep.subr.mxu0 0.0
    %1026 = vmatpush1.msra.mxu0 %v62
    %1027 = vmatprep.subr.mxu0 0.0
    %1028 = vmatpush2.msra.mxu0 0.0
    %1029 = vmatprep.subr.mxu0 0.0
    %1030 = vmatpush2.msra.mxu0 0.0
    %1031 = vmatprep.subr.mxu0 0.0
    %1032 = vmatpush2.msra.mxu0 0.0
    %1033 = vmatprep.subr.mxu0 0.0
    %1034 = vmatpush2.msra.mxu0 0.0
    %1035 = vmatprep.subr.mxu0 0.0
    %1036 = vmatpush2.msra.mxu0 0.0
    %1037 = vmatprep.subr.mxu0 0.0
    %1038 = vmatpush2.msra.mxu0 0.0
    %1039 = vmatprep.subr.mxu0 0.0
    %1040 = vmatpush2.msra.mxu0 0.0
    %1041 = vmatprep.subr.mxu0 0.0
    %1042 = vmatpush2.msra.mxu0 0.0
    %1043 = vmatprep.subr.mxu0 0.0
    %1044 = vmatpush2.msra.mxu0 0.0
    %1045 = vmatprep.subr.mxu0 0.0
    %1046 = vmatpush2.msra.mxu0 0.0
    %1047 = vmatprep.subr.mxu0 0.0
    %1048 = vmatpush2.msra.mxu0 0.0
    %1049 = vmatprep.subr.mxu0 0.0
    %1050 = vmatpush2.msra.mxu0 0.0
    %1051 = vmatprep.subr.mxu0 0.0
    %1052 = vmatpush2.msra.mxu0 0.0
    %1053 = vmatprep.subr.mxu0 0.0
    %1054 = vmatpush2.msra.mxu0 0.0
    %1055 = vmatprep.subr.mxu0 0.0
    %1056 = vmatpush2.msra.mxu0 0.0
    %1057 = vmatprep.subr.mxu0 0.0
    %1058 = vmatpush2.msra.mxu0 0.0
    %1059 = vmatprep.mubr.f32.mxu0 0.0
    %1060 = vmatmul.mubr.f32.gmra.mxu0 %v990
    %v1061 = vpop.f32.mrf.mxu0
    %v1062 = vadd.f32 %v987, %v1061
    %v1063 = vpop.f32.mrf.mxu0
    %1064 = vmatprep.mubr.f32.mxu0 0.0
    %1065 = vmatmul.mubr.f32.gmra.mxu0 %v993
    %v1066 = vpop.f32.mrf.mxu0
    %v1067 = vadd.f32 %v987, %v1066
    %v1068 = vpop.f32.mrf.mxu0
    %1069 = vdwg.mxu0
    %1070 = vmatprep.subr.mxu0 0.0
    %1071 = vmatpush1.msra.mxu0 0.0
    %1072 = vmatprep.subr.mxu0 0.0
    %1073 = vmatpush1.msra.mxu0 0.0
    %1074 = vmatprep.subr.mxu0 0.0
    %1075 = vmatpush1.msra.mxu0 0.0
    %1076 = vmatprep.subr.mxu0 0.0
    %1077 = vmatpush1.msra.mxu0 0.0
    %1078 = vmatprep.subr.mxu0 0.0
    %1079 = vmatpush1.msra.mxu0 0.0
    %1080 = vmatprep.subr.mxu0 0.0
    %1081 = vmatpush1.msra.mxu0 0.0
    %1082 = vmatprep.subr.mxu0 0.0
    %1083 = vmatpush1.msra.mxu0 0.0
    %1084 = vmatprep.subr.mxu0 0.0
    %1085 = vmatpush1.msra.mxu0 0.0
    %1086 = vmatprep.subr.mxu0 0.0
    %1087 = vmatpush1.msra.mxu0 0.0
    %1088 = vmatprep.subr.mxu0 0.0
    %1089 = vmatpush1.msra.mxu0 0.0
    %1090 = vmatprep.subr.mxu0 0.0
    %1091 = vmatpush1.msra.mxu0 0.0
    %1092 = vmatprep.subr.mxu0 0.0
    %1093 = vmatpush1.msra.mxu0 0.0
    %1094 = vmatprep.subr.mxu0 0.0
    %1095 = vmatpush1.msra.mxu0 %v61
    %1096 = vmatprep.subr.mxu0 0.0
    %1097 = vmatpush1.msra.mxu0 %v60
    %1098 = vmatprep.subr.mxu0 0.0
    %1099 = vmatpush1.msra.mxu0 %v59
    %1100 = vmatprep.subr.mxu0 0.0
    %1101 = vmatpush1.msra.mxu0 %v58
    %1102 = vmatprep.subr.mxu0 0.0
    %1103 = vmatpush2.msra.mxu0 0.0
    %1104 = vmatprep.subr.mxu0 0.0
    %1105 = vmatpush2.msra.mxu0 0.0
    %1106 = vmatprep.subr.mxu0 0.0
    %1107 = vmatpush2.msra.mxu0 0.0
    %1108 = vmatprep.subr.mxu0 0.0
    %1109 = vmatpush2.msra.mxu0 0.0
    %1110 = vmatprep.subr.mxu0 0.0
    %1111 = vmatpush2.msra.mxu0 0.0
    %1112 = vmatprep.subr.mxu0 0.0
    %1113 = vmatpush2.msra.mxu0 0.0
    %1114 = vmatprep.subr.mxu0 0.0
    %1115 = vmatpush2.msra.mxu0 0.0
    %1116 = vmatprep.subr.mxu0 0.0
    %1117 = vmatpush2.msra.mxu0 0.0
    %1118 = vmatprep.subr.mxu0 0.0
    %1119 = vmatpush2.msra.mxu0 0.0
    %1120 = vmatprep.subr.mxu0 0.0
    %1121 = vmatpush2.msra.mxu0 0.0
    %1122 = vmatprep.subr.mxu0 0.0
    %1123 = vmatpush2.msra.mxu0 0.0
    %1124 = vmatprep.subr.mxu0 0.0
    %1125 = vmatpush2.msra.mxu0 0.0
    %1126 = vmatprep.subr.mxu0 0.0
    %1127 = vmatpush2.msra.mxu0 0.0
    %1128 = vmatprep.subr.mxu0 0.0
    %1129 = vmatpush2.msra.mxu0 0.0
    %1130 = vmatprep.subr.mxu0 0.0
    %1131 = vmatpush2.msra.mxu0 0.0
    %1132 = vmatprep.subr.mxu0 0.0
    %1133 = vmatpush2.msra.mxu0 0.0
    %1134 = vmatprep.mubr.f32.mxu0 0.0
    %1135 = vmatmul.mubr.f32.gmra.mxu0 %v113
    %v1136 = vpop.f32.mrf.mxu0
    %v1137 = vadd.f32 %v79, %v1136
    %v1138 = vpop.f32.mrf.mxu0
    %1139 = vdwg.mxu0
    %v1140 = vadd.f32 %v1062, %v1137
    %v1141 = vxor.u32 %v1140, 2147483648
    %v1142 = vmul.f32 %v1141, 1.442695
    %v1143 = vpow.pop %v1142
    %v1144 = vadd.f32 %v1143, 1.0
    %v1145 = vrcp.pop %v1144
    %v1146 = vmul.f32 1.0, %v1145
    %1148 = vrot.lane.b32.xlu0 %v1137, 64
    %v1149 = vpop.permute.xlu0 %1148
    %v1151 = vmul.f32 %v1146, %v1149
    %1153 = vrot.lane.b32.xlu0 %v1151, 64
    %v1154 = vpop.permute.xlu0 %1153
    %v1156 = vadd.f32 %v1062, %v1154
    %v1157 = vtanh.pop %v1156
    %v1158 = vsub.f32 1.0, %v1146
    %1160 = vrot.lane.b32.xlu0 %v1157, 96
    %v1161 = vpop.permute.xlu0 %1160
    %v1163 = vmul.f32 %v1158, %v1161
    %v1164 = vmul.f32 %v1146, 0.0
    %v1165 = vadd.f32 %v1163, %v1164
    %1167 = vrot.lane.b32.xlu0 %v1165, 96
    %v1168 = vpop.permute.xlu0 %1167
    %v1169 = vsel %vm111, %v1168, 0
    %1171 = vmatprep.subr.mxu0 0.0
    %1172 = vmatpush1.msra.mxu0 0.0
    %1173 = vmatprep.subr.mxu0 0.0
    %1174 = vmatpush1.msra.mxu0 0.0
    %1175 = vmatprep.subr.mxu0 0.0
    %1176 = vmatpush1.msra.mxu0 0.0
    %1177 = vmatprep.subr.mxu0 0.0
    %1178 = vmatpush1.msra.mxu0 0.0
    %1179 = vmatprep.subr.mxu0 0.0
    %1180 = vmatpush1.msra.mxu0 0.0
    %1181 = vmatprep.subr.mxu0 0.0
    %1182 = vmatpush1.msra.mxu0 0.0
    %1183 = vmatprep.subr.mxu0 0.0
    %1184 = vmatpush1.msra.mxu0 0.0
    %1185 = vmatprep.subr.mxu0 0.0
    %1186 = vmatpush1.msra.mxu0 0.0
    %1187 = vmatprep.subr.mxu0 0.0
    %1188 = vmatpush1.msra.mxu0 0.0
    %1189 = vmatprep.subr.mxu0 0.0
    %1190 = vmatpush1.msra.mxu0 0.0
    %1191 = vmatprep.subr.mxu0 0.0
    %1192 = vmatpush1.msra.mxu0 0.0
    %1193 = vmatprep.subr.mxu0 0.0
    %1194 = vmatpush1.msra.mxu0 0.0
    %1195 = vmatprep.subr.mxu0 0.0
    %1196 = vmatpush1.msra.mxu0 %v61
    %1197 = vmatprep.subr.mxu0 0.0
    %1198 = vmatpush1.msra.mxu0 %v60
    %1199 = vmatprep.subr.mxu0 0.0
    %1200 = vmatpush1.msra.mxu0 %v59
    %1201 = vmatprep.subr.mxu0 0.0
    %1202 = vmatpush1.msra.mxu0 %v58
    %1203 = vmatprep.subr.mxu0 0.0
    %1204 = vmatpush2.msra.mxu0 0.0
    %1205 = vmatprep.subr.mxu0 0.0
    %1206 = vmatpush2.msra.mxu0 0.0
    %1207 = vmatprep.subr.mxu0 0.0
    %1208 = vmatpush2.msra.mxu0 0.0
    %1209 = vmatprep.subr.mxu0 0.0
    %1210 = vmatpush2.msra.mxu0 0.0
    %1211 = vmatprep.subr.mxu0 0.0
    %1212 = vmatpush2.msra.mxu0 0.0
    %1213 = vmatprep.subr.mxu0 0.0
    %1214 = vmatpush2.msra.mxu0 0.0
    %1215 = vmatprep.subr.mxu0 0.0
    %1216 = vmatpush2.msra.mxu0 0.0
    %1217 = vmatprep.subr.mxu0 0.0
    %1218 = vmatpush2.msra.mxu0 0.0
    %1219 = vmatprep.subr.mxu0 0.0
    %1220 = vmatpush2.msra.mxu0 0.0
    %1221 = vmatprep.subr.mxu0 0.0
    %1222 = vmatpush2.msra.mxu0 0.0
    %1223 = vmatprep.subr.mxu0 0.0
    %1224 = vmatpush2.msra.mxu0 0.0
    %1225 = vmatprep.subr.mxu0 0.0
    %1226 = vmatpush2.msra.mxu0 0.0
    %1227 = vmatprep.subr.mxu0 0.0
    %1228 = vmatpush2.msra.mxu0 0.0
    %1229 = vmatprep.subr.mxu0 0.0
    %1230 = vmatpush2.msra.mxu0 0.0
    %1231 = vmatprep.subr.mxu0 0.0
    %1232 = vmatpush2.msra.mxu0 0.0
    %1233 = vmatprep.subr.mxu0 0.0
    %1234 = vmatpush2.msra.mxu0 0.0
    %1235 = vmatprep.mubr.f32.mxu0 0.0
    %1236 = vmatmul.mubr.f32.gmra.mxu0 %v1169
    %v1237 = vpop.f32.mrf.mxu0
    %v1238 = vadd.f32 %v79, %v1237
    %v1239 = vpop.f32.mrf.mxu0
    %1240 = vdwg.mxu0
    %v1242 = vrot.slane %v1238, 6
    %v1244 = vadd.f32 %v1062, %v1242
    %v1245 = vxor.u32 %v1244, 2147483648
    %v1246 = vmul.f32 %v1245, 1.442695
    %v1247 = vpow.pop %v1246
    %v1248 = vadd.f32 %v1247, 1.0
    %v1249 = vrcp.pop %v1248
    %v1250 = vmul.f32 1.0, %v1249
    %1251 = vrot.lane.b32.xlu0 %v1242, 64
    %v1252 = vpop.permute.xlu0 %1251
    %v1254 = vmul.f32 %v1250, %v1252
    %1256 = vrot.lane.b32.xlu0 %v1254, 64
    %v1257 = vpop.permute.xlu0 %1256
    %v1259 = vadd.f32 %v1062, %v1257
    %v1260 = vtanh.pop %v1259
    %v1261 = vsub.f32 1.0, %v1250
    %1263 = vrot.lane.b32.xlu0 %v1260, 96
    %v1264 = vpop.permute.xlu0 %1263
    %v1266 = vmul.f32 %v1261, %v1264
    %v1267 = vrot.slane %v1165, 6
    %v1269 = vmul.f32 %v1250, %v1267
    %v1270 = vadd.f32 %v1266, %v1269
    %v1272 = vrot.slane %v1270, 2
    %1273 = vrot.lane.b32.xlu0 %v1272, 96
    %v1274 = vpop.permute.xlu0 %1273
    %v1275 = vsel %vm111, %v1274, 0
    %1277 = vmatprep.subr.mxu0 0.0
    %1278 = vmatpush1.msra.mxu0 0.0
    %1279 = vmatprep.subr.mxu0 0.0
    %1280 = vmatpush1.msra.mxu0 0.0
    %1281 = vmatprep.subr.mxu0 0.0
    %1282 = vmatpush1.msra.mxu0 0.0
    %1283 = vmatprep.subr.mxu0 0.0
    %1284 = vmatpush1.msra.mxu0 0.0
    %1285 = vmatprep.subr.mxu0 0.0
    %1286 = vmatpush1.msra.mxu0 0.0
    %1287 = vmatprep.subr.mxu0 0.0
    %1288 = vmatpush1.msra.mxu0 0.0
    %1289 = vmatprep.subr.mxu0 0.0
    %1290 = vmatpush1.msra.mxu0 0.0
    %1291 = vmatprep.subr.mxu0 0.0
    %1292 = vmatpush1.msra.mxu0 0.0
    %1293 = vmatprep.subr.mxu0 0.0
    %1294 = vmatpush1.msra.mxu0 0.0
    %1295 = vmatprep.subr.mxu0 0.0
    %1296 = vmatpush1.msra.mxu0 0.0
    %1297 = vmatprep.subr.mxu0 0.0
    %1298 = vmatpush1.msra.mxu0 0.0
    %1299 = vmatprep.subr.mxu0 0.0
    %1300 = vmatpush1.msra.mxu0 0.0
    %1301 = vmatprep.subr.mxu0 0.0
    %1302 = vmatpush1.msra.mxu0 %v61
    %1303 = vmatprep.subr.mxu0 0.0
    %1304 = vmatpush1.msra.mxu0 %v60
    %1305 = vmatprep.subr.mxu0 0.0
    %1306 = vmatpush1.msra.mxu0 %v59
    %1307 = vmatprep.subr.mxu0 0.0
    %1308 = vmatpush1.msra.mxu0 %v58
    %1309 = vmatprep.subr.mxu0 0.0
    %1310 = vmatpush2.msra.mxu0 0.0
    %1311 = vmatprep.subr.mxu0 0.0
    %1312 = vmatpush2.msra.mxu0 0.0
    %1313 = vmatprep.subr.mxu0 0.0
    %1314 = vmatpush2.msra.mxu0 0.0
    %1315 = vmatprep.subr.mxu0 0.0
    %1316 = vmatpush2.msra.mxu0 0.0
    %1317 = vmatprep.subr.mxu0 0.0
    %1318 = vmatpush2.msra.mxu0 0.0
    %1319 = vmatprep.subr.mxu0 0.0
    %1320 = vmatpush2.msra.mxu0 0.0
    %1321 = vmatprep.subr.mxu0 0.0
    %1322 = vmatpush2.msra.mxu0 0.0
    %1323 = vmatprep.subr.mxu0 0.0
    %1324 = vmatpush2.msra.mxu0 0.0
    %1325 = vmatprep.subr.mxu0 0.0
    %1326 = vmatpush2.msra.mxu0 0.0
    %1327 = vmatprep.subr.mxu0 0.0
    %1328 = vmatpush2.msra.mxu0 0.0
    %1329 = vmatprep.subr.mxu0 0.0
    %1330 = vmatpush2.msra.mxu0 0.0
    %1331 = vmatprep.subr.mxu0 0.0
    %1332 = vmatpush2.msra.mxu0 0.0
    %1333 = vmatprep.subr.mxu0 0.0
    %1334 = vmatpush2.msra.mxu0 0.0
    %1335 = vmatprep.subr.mxu0 0.0
    %1336 = vmatpush2.msra.mxu0 0.0
    %1337 = vmatprep.subr.mxu0 0.0
    %1338 = vmatpush2.msra.mxu0 0.0
    %1339 = vmatprep.subr.mxu0 0.0
    %1340 = vmatpush2.msra.mxu0 0.0
    %1341 = vmatprep.mubr.f32.mxu0 0.0
    %1342 = vmatmul.mubr.f32.gmra.mxu0 %v1275
    %v1343 = vpop.f32.mrf.mxu0
    %v1344 = vadd.f32 %v79, %v1343
    %v1345 = vpop.f32.mrf.mxu0
    %1346 = vdwg.mxu0
    %v1348 = vrot.slane %v1344, 4
    %v1350 = vadd.f32 %v1062, %v1348
    %v1351 = vxor.u32 %v1350, 2147483648
    %v1352 = vmul.f32 %v1351, 1.442695
    %v1353 = vpow.pop %v1352
    %v1354 = vadd.f32 %v1353, 1.0
    %v1355 = vrcp.pop %v1354
    %v1356 = vmul.f32 1.0, %v1355
    %1357 = vrot.lane.b32.xlu0 %v1348, 64
    %v1358 = vpop.permute.xlu0 %1357
    %v1360 = vmul.f32 %v1356, %v1358
    %1362 = vrot.lane.b32.xlu0 %v1360, 64
    %v1363 = vpop.permute.xlu0 %1362
    %v1365 = vadd.f32 %v1062, %v1363
    %v1366 = vtanh.pop %v1365
    %v1367 = vsub.f32 1.0, %v1356
    %1369 = vrot.lane.b32.xlu0 %v1366, 96
    %v1370 = vpop.permute.xlu0 %1369
    %v1372 = vmul.f32 %v1367, %v1370
    %v1373 = vrot.slane %v1270, 6
    %v1375 = vmul.f32 %v1356, %v1373
    %v1376 = vadd.f32 %v1372, %v1375
    %v1378 = vrot.slane %v1376, 4
    %1379 = vrot.lane.b32.xlu0 %v1378, 96
    %v1380 = vpop.permute.xlu0 %1379
    %v1381 = vsel %vm111, %v1380, 0
    %1383 = vmatprep.subr.mxu0 0.0
    %1384 = vmatpush1.msra.mxu0 0.0
    %1385 = vmatprep.subr.mxu0 0.0
    %1386 = vmatpush1.msra.mxu0 0.0
    %1387 = vmatprep.subr.mxu0 0.0
    %1388 = vmatpush1.msra.mxu0 0.0
    %1389 = vmatprep.subr.mxu0 0.0
    %1390 = vmatpush1.msra.mxu0 0.0
    %1391 = vmatprep.subr.mxu0 0.0
    %1392 = vmatpush1.msra.mxu0 0.0
    %1393 = vmatprep.subr.mxu0 0.0
    %1394 = vmatpush1.msra.mxu0 0.0
    %1395 = vmatprep.subr.mxu0 0.0
    %1396 = vmatpush1.msra.mxu0 0.0
    %1397 = vmatprep.subr.mxu0 0.0
    %1398 = vmatpush1.msra.mxu0 0.0
    %1399 = vmatprep.subr.mxu0 0.0
    %1400 = vmatpush1.msra.mxu0 0.0
    %1401 = vmatprep.subr.mxu0 0.0
    %1402 = vmatpush1.msra.mxu0 0.0
    %1403 = vmatprep.subr.mxu0 0.0
    %1404 = vmatpush1.msra.mxu0 0.0
    %1405 = vmatprep.subr.mxu0 0.0
    %1406 = vmatpush1.msra.mxu0 0.0
    %1407 = vmatprep.subr.mxu0 0.0
    %1408 = vmatpush1.msra.mxu0 %v61
    %1409 = vmatprep.subr.mxu0 0.0
    %1410 = vmatpush1.msra.mxu0 %v60
    %1411 = vmatprep.subr.mxu0 0.0
    %1412 = vmatpush1.msra.mxu0 %v59
    %1413 = vmatprep.subr.mxu0 0.0
    %1414 = vmatpush1.msra.mxu0 %v58
    %1415 = vmatprep.subr.mxu0 0.0
    %1416 = vmatpush2.msra.mxu0 0.0
    %1417 = vmatprep.subr.mxu0 0.0
    %1418 = vmatpush2.msra.mxu0 0.0
    %1419 = vmatprep.subr.mxu0 0.0
    %1420 = vmatpush2.msra.mxu0 0.0
    %1421 = vmatprep.subr.mxu0 0.0
    %1422 = vmatpush2.msra.mxu0 0.0
    %1423 = vmatprep.subr.mxu0 0.0
    %1424 = vmatpush2.msra.mxu0 0.0
    %1425 = vmatprep.subr.mxu0 0.0
    %1426 = vmatpush2.msra.mxu0 0.0
    %1427 = vmatprep.subr.mxu0 0.0
    %1428 = vmatpush2.msra.mxu0 0.0
    %1429 = vmatprep.subr.mxu0 0.0
    %1430 = vmatpush2.msra.mxu0 0.0
    %1431 = vmatprep.subr.mxu0 0.0
    %1432 = vmatpush2.msra.mxu0 0.0
    %1433 = vmatprep.subr.mxu0 0.0
    %1434 = vmatpush2.msra.mxu0 0.0
    %1435 = vmatprep.subr.mxu0 0.0
    %1436 = vmatpush2.msra.mxu0 0.0
    %1437 = vmatprep.subr.mxu0 0.0
    %1438 = vmatpush2.msra.mxu0 0.0
    %1439 = vmatprep.subr.mxu0 0.0
    %1440 = vmatpush2.msra.mxu0 0.0
    %1441 = vmatprep.subr.mxu0 0.0
    %1442 = vmatpush2.msra.mxu0 0.0
    %1443 = vmatprep.subr.mxu0 0.0
    %1444 = vmatpush2.msra.mxu0 0.0
    %1445 = vmatprep.subr.mxu0 0.0
    %1446 = vmatpush2.msra.mxu0 0.0
    %1447 = vmatprep.mubr.f32.mxu0 0.0
    %1448 = vmatmul.mubr.f32.gmra.mxu0 %v1381
    %v1449 = vpop.f32.mrf.mxu0
    %v1450 = vadd.f32 %v79, %v1449
    %v1451 = vpop.f32.mrf.mxu0
    %1452 = vdwg.mxu0
    %v1454 = vrot.slane %v1450, 2
    %v1456 = vadd.f32 %v1062, %v1454
    %v1457 = vxor.u32 %v1456, 2147483648
    %v1458 = vmul.f32 %v1457, 1.442695
    %v1459 = vpow.pop %v1458
    %v1460 = vadd.f32 %v1459, 1.0
    %v1461 = vrcp.pop %v1460
    %v1462 = vmul.f32 1.0, %v1461
    %1463 = vrot.lane.b32.xlu0 %v1454, 64
    %v1464 = vpop.permute.xlu0 %1463
    %v1466 = vmul.f32 %v1462, %v1464
    %1468 = vrot.lane.b32.xlu0 %v1466, 64
    %v1469 = vpop.permute.xlu0 %1468
    %v1471 = vadd.f32 %v1062, %v1469
    %v1472 = vtanh.pop %v1471
    %v1473 = vsub.f32 1.0, %v1462
    %1475 = vrot.lane.b32.xlu0 %v1472, 96
    %v1476 = vpop.permute.xlu0 %1475
    %v1478 = vmul.f32 %v1473, %v1476
    %v1479 = vrot.slane %v1376, 6
    %v1481 = vmul.f32 %v1462, %v1479
    %v1482 = vadd.f32 %v1478, %v1481
    %v1484 = vrot.slane %v1482, 6
    %1485 = vrot.lane.b32.xlu0 %v1484, 96
    %v1486 = vpop.permute.xlu0 %1485
    %v1487 = vsel %vm111, %v1486, 0
    %1489 = vmatprep.subr.mxu0 0.0
    %1490 = vmatpush1.msra.mxu0 0.0
    %1491 = vmatprep.subr.mxu0 0.0
    %1492 = vmatpush1.msra.mxu0 0.0
    %1493 = vmatprep.subr.mxu0 0.0
    %1494 = vmatpush1.msra.mxu0 0.0
    %1495 = vmatprep.subr.mxu0 0.0
    %1496 = vmatpush1.msra.mxu0 0.0
    %1497 = vmatprep.subr.mxu0 0.0
    %1498 = vmatpush1.msra.mxu0 0.0
    %1499 = vmatprep.subr.mxu0 0.0
    %1500 = vmatpush1.msra.mxu0 0.0
    %1501 = vmatprep.subr.mxu0 0.0
    %1502 = vmatpush1.msra.mxu0 0.0
    %1503 = vmatprep.subr.mxu0 0.0
    %1504 = vmatpush1.msra.mxu0 0.0
    %1505 = vmatprep.subr.mxu0 0.0
    %1506 = vmatpush1.msra.mxu0 0.0
    %1507 = vmatprep.subr.mxu0 0.0
    %1508 = vmatpush1.msra.mxu0 0.0
    %1509 = vmatprep.subr.mxu0 0.0
    %1510 = vmatpush1.msra.mxu0 0.0
    %1511 = vmatprep.subr.mxu0 0.0
    %1512 = vmatpush1.msra.mxu0 0.0
    %1513 = vmatprep.subr.mxu0 0.0
    %1514 = vmatpush1.msra.mxu0 %v61
    %1515 = vmatprep.subr.mxu0 0.0
    %1516 = vmatpush1.msra.mxu0 %v60
    %1517 = vmatprep.subr.mxu0 0.0
    %1518 = vmatpush1.msra.mxu0 %v59
    %1519 = vmatprep.subr.mxu0 0.0
    %1520 = vmatpush1.msra.mxu0 %v58
    %1521 = vmatprep.subr.mxu0 0.0
    %1522 = vmatpush2.msra.mxu0 0.0
    %1523 = vmatprep.subr.mxu0 0.0
    %1524 = vmatpush2.msra.mxu0 0.0
    %1525 = vmatprep.subr.mxu0 0.0
    %1526 = vmatpush2.msra.mxu0 0.0
    %1527 = vmatprep.subr.mxu0 0.0
    %1528 = vmatpush2.msra.mxu0 0.0
    %1529 = vmatprep.subr.mxu0 0.0
    %1530 = vmatpush2.msra.mxu0 0.0
    %1531 = vmatprep.subr.mxu0 0.0
    %1532 = vmatpush2.msra.mxu0 0.0
    %1533 = vmatprep.subr.mxu0 0.0
    %1534 = vmatpush2.msra.mxu0 0.0
    %1535 = vmatprep.subr.mxu0 0.0
    %1536 = vmatpush2.msra.mxu0 0.0
    %1537 = vmatprep.subr.mxu0 0.0
    %1538 = vmatpush2.msra.mxu0 0.0
    %1539 = vmatprep.subr.mxu0 0.0
    %1540 = vmatpush2.msra.mxu0 0.0
    %1541 = vmatprep.subr.mxu0 0.0
    %1542 = vmatpush2.msra.mxu0 0.0
    %1543 = vmatprep.subr.mxu0 0.0
    %1544 = vmatpush2.msra.mxu0 0.0
    %1545 = vmatprep.subr.mxu0 0.0
    %1546 = vmatpush2.msra.mxu0 0.0
    %1547 = vmatprep.subr.mxu0 0.0
    %1548 = vmatpush2.msra.mxu0 0.0
    %1549 = vmatprep.subr.mxu0 0.0
    %1550 = vmatpush2.msra.mxu0 0.0
    %1551 = vmatprep.subr.mxu0 0.0
    %1552 = vmatpush2.msra.mxu0 0.0
    %1553 = vmatprep.mubr.f32.mxu0 0.0
    %1554 = vmatmul.mubr.f32.gmra.mxu0 %v1487
    %v1555 = vpop.f32.mrf.mxu0
    %v1556 = vadd.f32 %v79, %v1555
    %v1557 = vpop.f32.mrf.mxu0
    %1558 = vdwg.mxu0
    %v1559 = vadd.f32 %v1067, %v1556
    %v1560 = vxor.u32 %v1559, 2147483648
    %v1561 = vmul.f32 %v1560, 1.442695
    %v1562 = vpow.pop %v1561
    %v1563 = vadd.f32 %v1562, 1.0
    %v1564 = vrcp.pop %v1563
    %v1565 = vmul.f32 1.0, %v1564
    %1567 = vrot.lane.b32.xlu0 %v1556, 64
    %v1568 = vpop.permute.xlu0 %1567
    %v1570 = vmul.f32 %v1565, %v1568
    %1572 = vrot.lane.b32.xlu0 %v1570, 64
    %v1573 = vpop.permute.xlu0 %1572
    %v1575 = vadd.f32 %v1067, %v1573
    %v1576 = vtanh.pop %v1575
    %v1577 = vsub.f32 1.0, %v1565
    %1579 = vrot.lane.b32.xlu0 %v1576, 96
    %v1580 = vpop.permute.xlu0 %1579
    %v1582 = vmul.f32 %v1577, %v1580
    %v1584 = vmul.f32 %v1565, %v1484
    %v1585 = vadd.f32 %v1582, %v1584
    %1587 = vrot.lane.b32.xlu0 %v1585, 96
    %v1588 = vpop.permute.xlu0 %1587
    %v1589 = vsel %vm111, %v1588, 0
    %1591 = vmatprep.subr.mxu0 0.0
    %1592 = vmatpush1.msra.mxu0 0.0
    %1593 = vmatprep.subr.mxu0 0.0
    %1594 = vmatpush1.msra.mxu0 0.0
    %1595 = vmatprep.subr.mxu0 0.0
    %1596 = vmatpush1.msra.mxu0 0.0
    %1597 = vmatprep.subr.mxu0 0.0
    %1598 = vmatpush1.msra.mxu0 0.0
    %1599 = vmatprep.subr.mxu0 0.0
    %1600 = vmatpush1.msra.mxu0 0.0
    %1601 = vmatprep.subr.mxu0 0.0
    %1602 = vmatpush1.msra.mxu0 0.0
    %1603 = vmatprep.subr.mxu0 0.0
    %1604 = vmatpush1.msra.mxu0 0.0
    %1605 = vmatprep.subr.mxu0 0.0
    %1606 = vmatpush1.msra.mxu0 0.0
    %1607 = vmatprep.subr.mxu0 0.0
    %1608 = vmatpush1.msra.mxu0 0.0
    %1609 = vmatprep.subr.mxu0 0.0
    %1610 = vmatpush1.msra.mxu0 0.0
    %1611 = vmatprep.subr.mxu0 0.0
    %1612 = vmatpush1.msra.mxu0 0.0
    %1613 = vmatprep.subr.mxu0 0.0
    %1614 = vmatpush1.msra.mxu0 0.0
    %1615 = vmatprep.subr.mxu0 0.0
    %1616 = vmatpush1.msra.mxu0 %v61
    %1617 = vmatprep.subr.mxu0 0.0
    %1618 = vmatpush1.msra.mxu0 %v60
    %1619 = vmatprep.subr.mxu0 0.0
    %1620 = vmatpush1.msra.mxu0 %v59
    %1621 = vmatprep.subr.mxu0 0.0
    %1622 = vmatpush1.msra.mxu0 %v58
    %1623 = vmatprep.subr.mxu0 0.0
    %1624 = vmatpush2.msra.mxu0 0.0
    %1625 = vmatprep.subr.mxu0 0.0
    %1626 = vmatpush2.msra.mxu0 0.0
    %1627 = vmatprep.subr.mxu0 0.0
    %1628 = vmatpush2.msra.mxu0 0.0
    %1629 = vmatprep.subr.mxu0 0.0
    %1630 = vmatpush2.msra.mxu0 0.0
    %1631 = vmatprep.subr.mxu0 0.0
    %1632 = vmatpush2.msra.mxu0 0.0
    %1633 = vmatprep.subr.mxu0 0.0
    %1634 = vmatpush2.msra.mxu0 0.0
    %1635 = vmatprep.subr.mxu0 0.0
    %1636 = vmatpush2.msra.mxu0 0.0
    %1637 = vmatprep.subr.mxu0 0.0
    %1638 = vmatpush2.msra.mxu0 0.0
    %1639 = vmatprep.subr.mxu0 0.0
    %1640 = vmatpush2.msra.mxu0 0.0
    %1641 = vmatprep.subr.mxu0 0.0
    %1642 = vmatpush2.msra.mxu0 0.0
    %1643 = vmatprep.subr.mxu0 0.0
    %1644 = vmatpush2.msra.mxu0 0.0
    %1645 = vmatprep.subr.mxu0 0.0
    %1646 = vmatpush2.msra.mxu0 0.0
    %1647 = vmatprep.subr.mxu0 0.0
    %1648 = vmatpush2.msra.mxu0 0.0
    %1649 = vmatprep.subr.mxu0 0.0
    %1650 = vmatpush2.msra.mxu0 0.0
    %1651 = vmatprep.subr.mxu0 0.0
    %1652 = vmatpush2.msra.mxu0 0.0
    %1653 = vmatprep.subr.mxu0 0.0
    %1654 = vmatpush2.msra.mxu0 0.0
    %1655 = vmatprep.mubr.f32.mxu0 0.0
    %1656 = vmatmul.mubr.f32.gmra.mxu0 %v1589
    %v1657 = vpop.f32.mrf.mxu0
    %v1658 = vadd.f32 %v79, %v1657
    %v1659 = vpop.f32.mrf.mxu0
    %1660 = vdwg.mxu0
    %v1662 = vrot.slane %v1658, 6
    %v1664 = vadd.f32 %v1067, %v1662
    %v1665 = vxor.u32 %v1664, 2147483648
    %v1666 = vmul.f32 %v1665, 1.442695
    %v1667 = vpow.pop %v1666
    %v1668 = vadd.f32 %v1667, 1.0
    %v1669 = vrcp.pop %v1668
    %v1670 = vmul.f32 1.0, %v1669
    %1671 = vrot.lane.b32.xlu0 %v1662, 64
    %v1672 = vpop.permute.xlu0 %1671
    %v1674 = vmul.f32 %v1670, %v1672
    %1676 = vrot.lane.b32.xlu0 %v1674, 64
    %v1677 = vpop.permute.xlu0 %1676
    %v1679 = vadd.f32 %v1067, %v1677
    %v1680 = vtanh.pop %v1679
    %v1681 = vsub.f32 1.0, %v1670
    %1683 = vrot.lane.b32.xlu0 %v1680, 96
    %v1684 = vpop.permute.xlu0 %1683
    %v1686 = vmul.f32 %v1681, %v1684
    %v1687 = vrot.slane %v1585, 6
    %v1689 = vmul.f32 %v1670, %v1687
    %v1690 = vadd.f32 %v1686, %v1689
    %v1692 = vrot.slane %v1690, 2
    %1693 = vrot.lane.b32.xlu0 %v1692, 96
    %v1694 = vpop.permute.xlu0 %1693
    %v1695 = vsel %vm111, %v1694, 0
    %1697 = vmatprep.subr.mxu0 0.0
    %1698 = vmatpush1.msra.mxu0 0.0
    %1699 = vmatprep.subr.mxu0 0.0
    %1700 = vmatpush1.msra.mxu0 0.0
    %1701 = vmatprep.subr.mxu0 0.0
    %1702 = vmatpush1.msra.mxu0 0.0
    %1703 = vmatprep.subr.mxu0 0.0
    %1704 = vmatpush1.msra.mxu0 0.0
    %1705 = vmatprep.subr.mxu0 0.0
    %1706 = vmatpush1.msra.mxu0 0.0
    %1707 = vmatprep.subr.mxu0 0.0
    %1708 = vmatpush1.msra.mxu0 0.0
    %1709 = vmatprep.subr.mxu0 0.0
    %1710 = vmatpush1.msra.mxu0 0.0
    %1711 = vmatprep.subr.mxu0 0.0
    %1712 = vmatpush1.msra.mxu0 0.0
    %1713 = vmatprep.subr.mxu0 0.0
    %1714 = vmatpush1.msra.mxu0 0.0
    %1715 = vmatprep.subr.mxu0 0.0
    %1716 = vmatpush1.msra.mxu0 0.0
    %1717 = vmatprep.subr.mxu0 0.0
    %1718 = vmatpush1.msra.mxu0 0.0
    %1719 = vmatprep.subr.mxu0 0.0
    %1720 = vmatpush1.msra.mxu0 0.0
    %1721 = vmatprep.subr.mxu0 0.0
    %1722 = vmatpush1.msra.mxu0 %v61
    %1723 = vmatprep.subr.mxu0 0.0
    %1724 = vmatpush1.msra.mxu0 %v60
    %1725 = vmatprep.subr.mxu0 0.0
    %1726 = vmatpush1.msra.mxu0 %v59
    %1727 = vmatprep.subr.mxu0 0.0
    %1728 = vmatpush1.msra.mxu0 %v58
    %1729 = vmatprep.subr.mxu0 0.0
    %1730 = vmatpush2.msra.mxu0 0.0
    %1731 = vmatprep.subr.mxu0 0.0
    %1732 = vmatpush2.msra.mxu0 0.0
    %1733 = vmatprep.subr.mxu0 0.0
    %1734 = vmatpush2.msra.mxu0 0.0
    %1735 = vmatprep.subr.mxu0 0.0
    %1736 = vmatpush2.msra.mxu0 0.0
    %1737 = vmatprep.subr.mxu0 0.0
    %1738 = vmatpush2.msra.mxu0 0.0
    %1739 = vmatprep.subr.mxu0 0.0
    %1740 = vmatpush2.msra.mxu0 0.0
    %1741 = vmatprep.subr.mxu0 0.0
    %1742 = vmatpush2.msra.mxu0 0.0
    %1743 = vmatprep.subr.mxu0 0.0
    %1744 = vmatpush2.msra.mxu0 0.0
    %1745 = vmatprep.subr.mxu0 0.0
    %1746 = vmatpush2.msra.mxu0 0.0
    %1747 = vmatprep.subr.mxu0 0.0
    %1748 = vmatpush2.msra.mxu0 0.0
    %1749 = vmatprep.subr.mxu0 0.0
    %1750 = vmatpush2.msra.mxu0 0.0
    %1751 = vmatprep.subr.mxu0 0.0
    %1752 = vmatpush2.msra.mxu0 0.0
    %1753 = vmatprep.subr.mxu0 0.0
    %1754 = vmatpush2.msra.mxu0 0.0
    %1755 = vmatprep.subr.mxu0 0.0
    %1756 = vmatpush2.msra.mxu0 0.0
    %1757 = vmatprep.subr.mxu0 0.0
    %1758 = vmatpush2.msra.mxu0 0.0
    %1759 = vmatprep.subr.mxu0 0.0
    %1760 = vmatpush2.msra.mxu0 0.0
    %1761 = vmatprep.mubr.f32.mxu0 0.0
    %1762 = vmatmul.mubr.f32.gmra.mxu0 %v1695
    %v1763 = vpop.f32.mrf.mxu0
    %v1764 = vadd.f32 %v79, %v1763
    %v1765 = vpop.f32.mrf.mxu0
    %1766 = vdwg.mxu0
    %v1768 = vrot.slane %v1764, 4
    %v1770 = vadd.f32 %v1067, %v1768
    %v1771 = vxor.u32 %v1770, 2147483648
    %v1772 = vmul.f32 %v1771, 1.442695
    %v1773 = vpow.pop %v1772
    %v1774 = vadd.f32 %v1773, 1.0
    %v1775 = vrcp.pop %v1774
    %v1776 = vmul.f32 1.0, %v1775
    %1777 = vrot.lane.b32.xlu0 %v1768, 64
    %v1778 = vpop.permute.xlu0 %1777
    %v1780 = vmul.f32 %v1776, %v1778
    %1782 = vrot.lane.b32.xlu0 %v1780, 64
    %v1783 = vpop.permute.xlu0 %1782
    %v1785 = vadd.f32 %v1067, %v1783
    %v1786 = vtanh.pop %v1785
    %v1787 = vsub.f32 1.0, %v1776
    %1789 = vrot.lane.b32.xlu0 %v1786, 96
    %v1790 = vpop.permute.xlu0 %1789
    %v1792 = vmul.f32 %v1787, %v1790
    %v1793 = vrot.slane %v1690, 6
    %v1795 = vmul.f32 %v1776, %v1793
    %v1796 = vadd.f32 %v1792, %v1795
    %v1798 = vrot.slane %v1796, 4
    %1799 = vrot.lane.b32.xlu0 %v1798, 96
    %v1800 = vpop.permute.xlu0 %1799
    %v1801 = vsel %vm111, %v1800, 0
    %1803 = vmatprep.subr.mxu0 0.0
    %1804 = vmatpush1.msra.mxu0 0.0
    %1805 = vmatprep.subr.mxu0 0.0
    %1806 = vmatpush1.msra.mxu0 0.0
    %1807 = vmatprep.subr.mxu0 0.0
    %1808 = vmatpush1.msra.mxu0 0.0
    %1809 = vmatprep.subr.mxu0 0.0
    %1810 = vmatpush1.msra.mxu0 0.0
    %1811 = vmatprep.subr.mxu0 0.0
    %1812 = vmatpush1.msra.mxu0 0.0
    %1813 = vmatprep.subr.mxu0 0.0
    %1814 = vmatpush1.msra.mxu0 0.0
    %1815 = vmatprep.subr.mxu0 0.0
    %1816 = vmatpush1.msra.mxu0 0.0
    %1817 = vmatprep.subr.mxu0 0.0
    %1818 = vmatpush1.msra.mxu0 0.0
    %1819 = vmatprep.subr.mxu0 0.0
    %1820 = vmatpush1.msra.mxu0 0.0
    %1821 = vmatprep.subr.mxu0 0.0
    %1822 = vmatpush1.msra.mxu0 0.0
    %1823 = vmatprep.subr.mxu0 0.0
    %1824 = vmatpush1.msra.mxu0 0.0
    %1825 = vmatprep.subr.mxu0 0.0
    %1826 = vmatpush1.msra.mxu0 0.0
    %1827 = vmatprep.subr.mxu0 0.0
    %1828 = vmatpush1.msra.mxu0 %v61
    %1829 = vmatprep.subr.mxu0 0.0
    %1830 = vmatpush1.msra.mxu0 %v60
    %1831 = vmatprep.subr.mxu0 0.0
    %1832 = vmatpush1.msra.mxu0 %v59
    %1833 = vmatprep.subr.mxu0 0.0
    %1834 = vmatpush1.msra.mxu0 %v58
    %1835 = vmatprep.subr.mxu0 0.0
    %1836 = vmatpush2.msra.mxu0 0.0
    %1837 = vmatprep.subr.mxu0 0.0
    %1838 = vmatpush2.msra.mxu0 0.0
    %1839 = vmatprep.subr.mxu0 0.0
    %1840 = vmatpush2.msra.mxu0 0.0
    %1841 = vmatprep.subr.mxu0 0.0
    %1842 = vmatpush2.msra.mxu0 0.0
    %1843 = vmatprep.subr.mxu0 0.0
    %1844 = vmatpush2.msra.mxu0 0.0
    %1845 = vmatprep.subr.mxu0 0.0
    %1846 = vmatpush2.msra.mxu0 0.0
    %1847 = vmatprep.subr.mxu0 0.0
    %1848 = vmatpush2.msra.mxu0 0.0
    %1849 = vmatprep.subr.mxu0 0.0
    %1850 = vmatpush2.msra.mxu0 0.0
    %1851 = vmatprep.subr.mxu0 0.0
    %1852 = vmatpush2.msra.mxu0 0.0
    %1853 = vmatprep.subr.mxu0 0.0
    %1854 = vmatpush2.msra.mxu0 0.0
    %1855 = vmatprep.subr.mxu0 0.0
    %1856 = vmatpush2.msra.mxu0 0.0
    %1857 = vmatprep.subr.mxu0 0.0
    %1858 = vmatpush2.msra.mxu0 0.0
    %1859 = vmatprep.subr.mxu0 0.0
    %1860 = vmatpush2.msra.mxu0 0.0
    %1861 = vmatprep.subr.mxu0 0.0
    %1862 = vmatpush2.msra.mxu0 0.0
    %1863 = vmatprep.subr.mxu0 0.0
    %1864 = vmatpush2.msra.mxu0 0.0
    %1865 = vmatprep.subr.mxu0 0.0
    %1866 = vmatpush2.msra.mxu0 0.0
    %1867 = vmatprep.mubr.f32.mxu0 0.0
    %1868 = vmatmul.mubr.f32.gmra.mxu0 %v1801
    %v1869 = vpop.f32.mrf.mxu0
    %v1870 = vadd.f32 %v79, %v1869
    %v1871 = vpop.f32.mrf.mxu0
    %1872 = vdwg.mxu0
    %v1874 = vrot.slane %v1870, 2
    %v1876 = vadd.f32 %v1067, %v1874
    %v1877 = vxor.u32 %v1876, 2147483648
    %v1878 = vmul.f32 %v1877, 1.442695
    %v1879 = vpow.pop %v1878
    %v1880 = vadd.f32 %v1879, 1.0
    %v1881 = vrcp.pop %v1880
    %v1882 = vmul.f32 1.0, %v1881
    %1883 = vrot.lane.b32.xlu0 %v1874, 64
    %v1884 = vpop.permute.xlu0 %1883
    %v1886 = vmul.f32 %v1882, %v1884
    %1888 = vrot.lane.b32.xlu0 %v1886, 64
    %v1889 = vpop.permute.xlu0 %1888
    %v1891 = vadd.f32 %v1067, %v1889
    %v1892 = vtanh.pop %v1891
    %v1893 = vsub.f32 1.0, %v1882
    %1895 = vrot.lane.b32.xlu0 %v1892, 96
    %v1896 = vpop.permute.xlu0 %1895
    %v1898 = vmul.f32 %v1893, %v1896
    %v1899 = vrot.slane %v1796, 6
    %v1901 = vmul.f32 %v1882, %v1899
    %v1902 = vadd.f32 %v1898, %v1901
    %v1903 = vld [vmem:[%s9] sm:$0xff]
    %v1904 = vld [vmem:[%s9 + $0x8] sm:$0xff]
    %v1905 = vld [vmem:[%s9 + $0x10] sm:$0xff]
    %v1906 = vld [vmem:[%s9 + $0x18] sm:$0xff]
    %v1907 = vld [vmem:[#allocation3] sm:$0x1]
    %v1909 = vlaneseq
    %v1910 = vshrl.u32 %v1909, 7
    %v1911 = vsub.s32 0, %v1910
    %v1912 = vrot.slane %v1907, %v1911
    %v1915 = vrot.slane %v1902, 6
    %1916 = vrot.lane.b32.xlu0 %v1915, 96
    %v1917 = vpop.permute.xlu0 %1916
    %v1918 = vsel %vm111, %v1917, 0
    %1920 = vmatprep.subr.mxu0 0.0
    %1921 = vmatpush1.msra.mxu0 0.0
    %1922 = vmatprep.subr.mxu0 0.0
    %1923 = vmatpush1.msra.mxu0 0.0
    %1924 = vmatprep.subr.mxu0 0.0
    %1925 = vmatpush1.msra.mxu0 0.0
    %1926 = vmatprep.subr.mxu0 0.0
    %1927 = vmatpush1.msra.mxu0 0.0
    %1928 = vmatprep.subr.mxu0 0.0
    %1929 = vmatpush1.msra.mxu0 0.0
    %1930 = vmatprep.subr.mxu0 0.0
    %1931 = vmatpush1.msra.mxu0 0.0
    %1932 = vmatprep.subr.mxu0 0.0
    %1933 = vmatpush1.msra.mxu0 0.0
    %1934 = vmatprep.subr.mxu0 0.0
    %1935 = vmatpush1.msra.mxu0 0.0
    %1936 = vmatprep.subr.mxu0 0.0
    %1937 = vmatpush1.msra.mxu0 0.0
    %1938 = vmatprep.subr.mxu0 0.0
    %1939 = vmatpush1.msra.mxu0 0.0
    %1940 = vmatprep.subr.mxu0 0.0
    %1941 = vmatpush1.msra.mxu0 0.0
    %1942 = vmatprep.subr.mxu0 0.0
    %1943 = vmatpush1.msra.mxu0 0.0
    %1944 = vmatprep.subr.mxu0 0.0
    %1945 = vmatpush1.msra.mxu0 %v1906
    %1946 = vmatprep.subr.mxu0 0.0
    %1947 = vmatpush1.msra.mxu0 %v1905
    %1948 = vmatprep.subr.mxu0 0.0
    %1949 = vmatpush1.msra.mxu0 %v1904
    %1950 = vmatprep.subr.mxu0 0.0
    %1951 = vmatpush1.msra.mxu0 %v1903
    %1952 = vmatprep.subr.mxu0 0.0
    %1953 = vmatpush2.msra.mxu0 0.0
    %1954 = vmatprep.subr.mxu0 0.0
    %1955 = vmatpush2.msra.mxu0 0.0
    %1956 = vmatprep.subr.mxu0 0.0
    %1957 = vmatpush2.msra.mxu0 0.0
    %1958 = vmatprep.subr.mxu0 0.0
    %1959 = vmatpush2.msra.mxu0 0.0
    %1960 = vmatprep.subr.mxu0 0.0
    %1961 = vmatpush2.msra.mxu0 0.0
    %1962 = vmatprep.subr.mxu0 0.0
    %1963 = vmatpush2.msra.mxu0 0.0
    %1964 = vmatprep.subr.mxu0 0.0
    %1965 = vmatpush2.msra.mxu0 0.0
    %1966 = vmatprep.subr.mxu0 0.0
    %1967 = vmatpush2.msra.mxu0 0.0
    %1968 = vmatprep.subr.mxu0 0.0
    %1969 = vmatpush2.msra.mxu0 0.0
    %1970 = vmatprep.subr.mxu0 0.0
    %1971 = vmatpush2.msra.mxu0 0.0
    %1972 = vmatprep.subr.mxu0 0.0
    %1973 = vmatpush2.msra.mxu0 0.0
    %1974 = vmatprep.subr.mxu0 0.0
    %1975 = vmatpush2.msra.mxu0 0.0
    %1976 = vmatprep.subr.mxu0 0.0
    %1977 = vmatpush2.msra.mxu0 0.0
    %1978 = vmatprep.subr.mxu0 0.0
    %1979 = vmatpush2.msra.mxu0 0.0
    %1980 = vmatprep.subr.mxu0 0.0
    %1981 = vmatpush2.msra.mxu0 0.0
    %1982 = vmatprep.subr.mxu0 0.0
    %1983 = vmatpush2.msra.mxu0 0.0
    %1984 = vmatprep.mubr.f32.mxu0 0.0
    %1985 = vmatmul.mubr.f32.gmra.mxu0 %v1918
    %v1986 = vpop.f32.mrf.mxu0
    %v1987 = vadd.f32 %v1912, %v1986
    %v1988 = vpop.f32.mrf.mxu0
    %1989 = vdwg.mxu0
    %vm1990 = vcmask 1024
    %1991 = vst.msk [vmem:[%s11] sm:$0x3] %vm1990, %v1987
    // Predicated region
    $region50: #{gru_forward.1} parent=1 // pred_check
      _
    $region51: #{gru_forward.1} parent=1 // pred_check_branch
      %1993 = sbr.rel (0) target = $region53
    $region52: #{gru_forward.1} parent=1 // pred_region
      _
    $region53: #{gru_forward.1} parent=1 // pred_fallthru
      _
    // Predicated region
    $region54: #{gru_forward.1} parent=1 // pred_check
      _
    $region55: #{gru_forward.1} parent=1 // pred_check_branch
      %1995 = sbr.rel (0) target = $region57
    $region56: #{gru_forward.1} parent=1 // pred_region
      _
    $region57: #{gru_forward.1} parent=1 // pred_fallthru
      _
    %1996 = vsyncpa [#allocation5], 1

</llo_original>
